<compile_context>
chip_gen: v5e
topology: v5e:2x2
jax: 0.10.0
libtpu: 0.0.40
codegen_flags: <defaults>
</compile_context>

<pallas_src>
import numpy as np
import jax
import jax.numpy as jnp
from jax.experimental import pallas as pl
from jax.experimental.pallas import tpu as pltpu


# ----------------------------- Pallas kernel --------------------------------

def _double_conv_kernel(W, L):
    """W: image width. L: lanes per grid block (= samples_per_block * H * W)."""
    # Lane offset of each 3x3 tap relative to the output pixel (row-major HW).
    offsets = [(dh - 1) * W + (dw - 1) for dh in range(3) for dw in range(3)]

    def kernel(p1_ref, w1_ref, b1_ref, w2_ref, b2_ref, mask_ref, o_ref):
        # ---- conv1 + folded BN1 + ReLU: (C_out, L) = (C_out,9Ci) @ (9Ci,L) --
        y1 = jnp.dot(w1_ref[...], p1_ref[...],
                     preferred_element_type=jnp.float32)
        y1 = jnp.maximum(y1 + b1_ref[...], 0.0)              # (C_out, L) f32

        # ---- conv2 taps: lane rolls (XLU) + boundary masks, stacked on the
        #      sublane/K axis -> a single (9*C_out, L) bf16 MXU operand. ------
        taps = []
        for t, off in enumerate(offsets):
            r = y1 if off == 0 else pltpu.roll(y1, (-off) % L, axis=1)
            taps.append((r * mask_ref[t:t + 1, :]).astype(jnp.bfloat16))
        p2 = jnp.concatenate(taps, axis=0)                   # (9*C_out, L)

        # ---- conv2 + folded BN2 + ReLU --------------------------------------
        y2 = jnp.dot(w2_ref[...], p2, preferred_element_type=jnp.float32)
        o_ref[...] = jnp.maximum(y2 + b2_ref[...], 0.0)

    return kernel


# ----------------------------- Wrapper ---------------------------------------

def double_conv_forward(x, params, eps=1e-5, samples_per_block=None):
    """x: (N, C_in, H, W) float32 (NCHW). Returns (N, C_out, H, W) float32."""
    N, C_in, H, W = x.shape
    C_out = params["w1"].shape[0]
    P = H * W
    if samples_per_block is None:
        # Merge the whole batch into one grid step: best for single-TC
        # v5e/v6e at these sizes. Use N // 2 to split across v7x's two TCs.
        samples_per_block = N
    NB = samples_per_block
    assert N % NB == 0
    L = NB * P

    # ---- fold conv bias + BatchNorm (running stats) into weights/shift ------
    def fold(w_oihw, conv_b, gamma, beta, mean, var, k_in):
        s = gamma / jnp.sqrt(var + eps)                       # (C_out,)
        # im2col layout: column index = (dh*3 + dw) * k_in + c_in
        w_t = w_oihw.transpose(0, 2, 3, 1).reshape(C_out, 9 * k_in)
        w_t = (w_t * s[:, None]).astype(jnp.bfloat16)         # BN scale folded
        shift = (s * (conv_b - mean) + beta).reshape(C_out, 1)
        return w_t, shift.astype(jnp.float32)

    w1, b1 = fold(params["w1"], params["b1"], params["g1"], params["beta1"],
                  params["m1"], params["v1"], C_in)
    w2, b2 = fold(params["w2"], params["b2"], params["g2"], params["beta2"],
                  params["m2"], params["v2"], C_out)

    # ---- conv1 im2col in the wrapper (tiny tensor, done by XLA) -------------
    xp = jnp.pad(x, ((0, 0), (0, 0), (1, 1), (1, 1)))         # (N,Ci,H+2,W+2)
    taps = [xp[:, :, dh:dh + H, dw:dw + W].reshape(N, 1, C_in, P)
            for dh in range(3) for dw in range(3)]
    p1 = jnp.concatenate(taps, axis=1).reshape(N, 9 * C_in, P)
    p1 = p1.transpose(1, 0, 2).reshape(9 * C_in, N * P).astype(jnp.bfloat16)

    # ---- boundary masks for the 9 conv2 taps (per pixel, tiled per sample) --
    pix = jnp.arange(P)
    hh, ww = pix // W, pix % W
    rows = []
    for dh in range(3):
        for dw in range(3):
            ok = ((hh + dh - 1 >= 0) & (hh + dh - 1 < H) &
                  (ww + dw - 1 >= 0) & (ww + dw - 1 < W))
            rows.append(jnp.where(ok, 1.0, 0.0))
    mask = jnp.tile(jnp.stack(rows).astype(jnp.float32), (1, NB))   # (9, L)

    out = pl.pallas_call(
        _double_conv_kernel(W, L),
        out_shape=jax.ShapeDtypeStruct((C_out, N * P), jnp.float32),
        grid=(N // NB,),
        in_specs=[
            pl.BlockSpec((9 * C_in, L), lambda b: (0, b)),       # conv1 patches
            pl.BlockSpec((C_out, 9 * C_in), lambda b: (0, 0)),   # w1 (bf16)
            pl.BlockSpec((C_out, 1), lambda b: (0, 0)),          # shift1
            pl.BlockSpec((C_out, 9 * C_out), lambda b: (0, 0)),  # w2 (bf16)
            pl.BlockSpec((C_out, 1), lambda b: (0, 0)),          # shift2
            pl.BlockSpec((9, L), lambda b: (0, 0)),              # tap masks
        ],
        out_specs=pl.BlockSpec((C_out, L), lambda b: (0, b)),
        compiler_params=pltpu.CompilerParams(
            dimension_semantics=("parallel",)),
    )(p1, w1, b1, w2, b2, mask)

    # (C_out, N*P) lane-dense -> NCHW (tiny transpose in the wrapper).
    return out.reshape(C_out, N, H, W).transpose(1, 0, 2, 3)


# ----------------------------- Params & reference ----------------------------

def init_params(key, C_in, C_out):
    ks = jax.random.split(key, 12)
    p = {}
    p["w1"] = jax.random.normal(ks[0], (C_out, C_in, 3, 3), jnp.float32) * 0.2
    p["b1"] = jax.random.normal(ks[1], (C_out,), jnp.float32) * 0.1
    p["g1"] = 1.0 + 0.1 * jax.random.normal(ks[2], (C_out,), jnp.float32)
    p["beta1"] = 0.1 * jax.random.normal(ks[3], (C_out,), jnp.float32)
    p["m1"] = 0.1 * jax.random.normal(ks[4], (C_out,), jnp.float32)
    p["v1"] = 0.5 + jax.random.uniform(ks[5], (C_out,), jnp.float32)
    p["w2"] = jax.random.normal(ks[6], (C_out, C_out, 3, 3), jnp.float32) * 0.1
    p["b2"] = jax.random.normal(ks[7], (C_out,), jnp.float32) * 0.1
    p["g2"] = 1.0 + 0.1 * jax.random.normal(ks[8], (C_out,), jnp.float32)
    p["beta2"] = 0.1 * jax.random.normal(ks[9], (C_out,), jnp.float32)
    p["m2"] = 0.1 * jax.random.normal(ks[10], (C_out,), jnp.float32)
    p["v2"] = 0.5 + jax.random.uniform(ks[11], (C_out,), jnp.float32)
    return p


def reference(x, params, eps=1e-5):
    def conv_bn_relu(x, w, b, g, beta, m, v):
        y = jax.lax.conv_general_dilated(
            x, w, window_strides=(1, 1), padding=((1, 1), (1, 1)),
            dimension_numbers=("NCHW", "OIHW", "NCHW"))
        y = y + b.reshape(1, -1, 1, 1)
        y = (g.reshape(1, -1, 1, 1) * (y - m.reshape(1, -1, 1, 1))
             / jnp.sqrt(v.reshape(1, -1, 1, 1) + eps) + beta.reshape(1, -1, 1, 1))
        return jnp.maximum(y, 0.0)

    y = conv_bn_relu(x, params["w1"], params["b1"], params["g1"],
                     params["beta1"], params["m1"], params["v1"])
    y = conv_bn_relu(y, params["w2"], params["b2"], params["g2"],
                     params["beta2"], params["m2"], params["v2"])
    return y


# ----------------------------- Main -------------------------------------------

if __name__ == "__main__":
    N, C_in, C_out, H, W = 2, 4, 32, 16, 16
    key = jax.random.PRNGKey(0)
    kx, kp = jax.random.split(key)
    x = jax.random.normal(kx, (N, C_in, H, W), jnp.float32)
    params = init_params(kp, C_in, C_out)

    out = jax.jit(double_conv_forward)(x, params)
    jax.block_until_ready(out)

    ref = reference(x, params)
    assert out.shape == (N, C_out, H, W)
    err = float(np.max(np.abs(np.asarray(out) - np.asarray(ref))))
    # bf16 MXU operands (per perf review) -> slightly looser tolerance than f32.
    assert np.allclose(np.asarray(out), np.asarray(ref),
                       atol=5e-2, rtol=2e-2), f"max abs err = {err}"

    print("KERNEL_OK")
</pallas_src>

<mosaic_0001>
module attributes {stable_mosaic.version = 11 : i64} {
  func.func @kernel(%arg0: i32, %arg1: memref<36x512xbf16, #tpu.memory_space<vmem>>, %arg2: memref<32x36xbf16, #tpu.memory_space<vmem>>, %arg3: memref<32x1xf32, #tpu.memory_space<vmem>>, %arg4: memref<32x288xbf16, #tpu.memory_space<vmem>>, %arg5: memref<32x1xf32, #tpu.memory_space<vmem>>, %arg6: memref<9x512xf32, #tpu.memory_space<vmem>>, %arg7: memref<32x512xf32, #tpu.memory_space<vmem>>) attributes {dimension_semantics = [#tpu.dimension_semantics<parallel>], iteration_bounds = array<i64: 1>, scalar_prefetch = 0 : i64, scratch_operands = 0 : i64, tpu.core_type = #tpu.core_type<tc>, window_params = [{transform_indices = @transform_0, window_bounds = array<i64: 36, 512>}, {pipeline_mode = #tpu.pipeline_mode<synchronous>, transform_indices = @transform_1, window_bounds = array<i64: 32, 36>}, {pipeline_mode = #tpu.pipeline_mode<synchronous>, transform_indices = @transform_2, window_bounds = array<i64: 32, 1>}, {pipeline_mode = #tpu.pipeline_mode<synchronous>, transform_indices = @transform_3, window_bounds = array<i64: 32, 288>}, {pipeline_mode = #tpu.pipeline_mode<synchronous>, transform_indices = @transform_4, window_bounds = array<i64: 32, 1>}, {pipeline_mode = #tpu.pipeline_mode<synchronous>, transform_indices = @transform_5, window_bounds = array<i64: 9, 512>}, {transform_indices = @transform_6, window_bounds = array<i64: 32, 512>}]} {
    %c0 = arith.constant 0 : index
    %c0_0 = arith.constant 0 : index
    %0 = vector.load %arg2[%c0, %c0_0] : memref<32x36xbf16, #tpu.memory_space<vmem>>, vector<32x36xbf16>
    %c0_1 = arith.constant 0 : index
    %c0_2 = arith.constant 0 : index
    %1 = vector.load %arg1[%c0_1, %c0_2] : memref<36x512xbf16, #tpu.memory_space<vmem>>, vector<36x512xbf16>
    %cst = arith.constant dense<0.000000e+00> : vector<32x512xf32>
    %2 = tpu.matmul %0, %1, %cst {dimension_numbers = #tpu.dot_dimension_numbers<[1], [0], [0], [1], [0, 0, 1, 1], [], []>} : vector<32x36xbf16>, vector<36x512xbf16>, vector<32x512xf32> -> vector<32x512xf32>
    %c0_3 = arith.constant 0 : index
    %c0_4 = arith.constant 0 : index
    %3 = vector.load %arg3[%c0_3, %c0_4] : memref<32x1xf32, #tpu.memory_space<vmem>>, vector<32x1xf32>
    %4 = vector.broadcast %3 : vector<32x1xf32> to vector<32x512xf32>
    %5 = arith.addf %2, %4 : vector<32x512xf32>
    %cst_5 = arith.constant 0.000000e+00 : f32
    %6 = vector.broadcast %cst_5 : f32 to vector<32x512xf32>
    %7 = arith.maximumf %5, %6 : vector<32x512xf32>
    %c17_i32 = arith.constant 17 : i32
    %8 = tpu.dynamic_rotate %7 by %c17_i32 dim 1 : vector<32x512xf32>, i32 -> vector<32x512xf32>
    %c0_6 = arith.constant 0 : index
    %c0_7 = arith.constant 0 : index
    %9 = vector.load %arg6[%c0_6, %c0_7] : memref<9x512xf32, #tpu.memory_space<vmem>>, vector<1x512xf32>
    %10 = vector.broadcast %9 : vector<1x512xf32> to vector<32x512xf32>
    %11 = arith.mulf %8, %10 : vector<32x512xf32>
    %12 = arith.truncf %11 : vector<32x512xf32> to vector<32x512xbf16>
    %c16_i32 = arith.constant 16 : i32
    %13 = tpu.dynamic_rotate %7 by %c16_i32 dim 1 : vector<32x512xf32>, i32 -> vector<32x512xf32>
    %c1 = arith.constant 1 : index
    %c0_8 = arith.constant 0 : index
    %14 = vector.load %arg6[%c1, %c0_8] : memref<9x512xf32, #tpu.memory_space<vmem>>, vector<1x512xf32>
    %15 = vector.broadcast %14 : vector<1x512xf32> to vector<32x512xf32>
    %16 = arith.mulf %13, %15 : vector<32x512xf32>
    %17 = arith.truncf %16 : vector<32x512xf32> to vector<32x512xbf16>
    %c15_i32 = arith.constant 15 : i32
    %18 = tpu.dynamic_rotate %7 by %c15_i32 dim 1 : vector<32x512xf32>, i32 -> vector<32x512xf32>
    %c2 = arith.constant 2 : index
    %c0_9 = arith.constant 0 : index
    %19 = vector.load %arg6[%c2, %c0_9] : memref<9x512xf32, #tpu.memory_space<vmem>>, vector<1x512xf32>
    %20 = vector.broadcast %19 : vector<1x512xf32> to vector<32x512xf32>
    %21 = arith.mulf %18, %20 : vector<32x512xf32>
    %22 = arith.truncf %21 : vector<32x512xf32> to vector<32x512xbf16>
    %c1_i32 = arith.constant 1 : i32
    %23 = tpu.dynamic_rotate %7 by %c1_i32 dim 1 : vector<32x512xf32>, i32 -> vector<32x512xf32>
    %c3 = arith.constant 3 : index
    %c0_10 = arith.constant 0 : index
    %24 = vector.load %arg6[%c3, %c0_10] : memref<9x512xf32, #tpu.memory_space<vmem>>, vector<1x512xf32>
    %25 = vector.broadcast %24 : vector<1x512xf32> to vector<32x512xf32>
    %26 = arith.mulf %23, %25 : vector<32x512xf32>
    %27 = arith.truncf %26 : vector<32x512xf32> to vector<32x512xbf16>
    %c4 = arith.constant 4 : index
    %c0_11 = arith.constant 0 : index
    %28 = vector.load %arg6[%c4, %c0_11] : memref<9x512xf32, #tpu.memory_space<vmem>>, vector<1x512xf32>
    %29 = vector.broadcast %28 : vector<1x512xf32> to vector<32x512xf32>
    %30 = arith.mulf %7, %29 : vector<32x512xf32>
    %31 = arith.truncf %30 : vector<32x512xf32> to vector<32x512xbf16>
    %c511_i32 = arith.constant 511 : i32
    %32 = tpu.dynamic_rotate %7 by %c511_i32 dim 1 : vector<32x512xf32>, i32 -> vector<32x512xf32>
    %c5 = arith.constant 5 : index
    %c0_12 = arith.constant 0 : index
    %33 = vector.load %arg6[%c5, %c0_12] : memref<9x512xf32, #tpu.memory_space<vmem>>, vector<1x512xf32>
    %34 = vector.broadcast %33 : vector<1x512xf32> to vector<32x512xf32>
    %35 = arith.mulf %32, %34 : vector<32x512xf32>
    %36 = arith.truncf %35 : vector<32x512xf32> to vector<32x512xbf16>
    %c497_i32 = arith.constant 497 : i32
    %37 = tpu.dynamic_rotate %7 by %c497_i32 dim 1 : vector<32x512xf32>, i32 -> vector<32x512xf32>
    %c6 = arith.constant 6 : index
    %c0_13 = arith.constant 0 : index
    %38 = vector.load %arg6[%c6, %c0_13] : memref<9x512xf32, #tpu.memory_space<vmem>>, vector<1x512xf32>
    %39 = vector.broadcast %38 : vector<1x512xf32> to vector<32x512xf32>
    %40 = arith.mulf %37, %39 : vector<32x512xf32>
    %41 = arith.truncf %40 : vector<32x512xf32> to vector<32x512xbf16>
    %c496_i32 = arith.constant 496 : i32
    %42 = tpu.dynamic_rotate %7 by %c496_i32 dim 1 : vector<32x512xf32>, i32 -> vector<32x512xf32>
    %c7 = arith.constant 7 : index
    %c0_14 = arith.constant 0 : index
    %43 = vector.load %arg6[%c7, %c0_14] : memref<9x512xf32, #tpu.memory_space<vmem>>, vector<1x512xf32>
    %44 = vector.broadcast %43 : vector<1x512xf32> to vector<32x512xf32>
    %45 = arith.mulf %42, %44 : vector<32x512xf32>
    %46 = arith.truncf %45 : vector<32x512xf32> to vector<32x512xbf16>
    %c495_i32 = arith.constant 495 : i32
    %47 = tpu.dynamic_rotate %7 by %c495_i32 dim 1 : vector<32x512xf32>, i32 -> vector<32x512xf32>
    %c8 = arith.constant 8 : index
    %c0_15 = arith.constant 0 : index
    %48 = vector.load %arg6[%c8, %c0_15] : memref<9x512xf32, #tpu.memory_space<vmem>>, vector<1x512xf32>
    %49 = vector.broadcast %48 : vector<1x512xf32> to vector<32x512xf32>
    %50 = arith.mulf %47, %49 : vector<32x512xf32>
    %51 = arith.truncf %50 : vector<32x512xf32> to vector<32x512xbf16>
    %52 = tpu.concatenate %12, %17, %22, %27, %31, %36, %41, %46, %51 in 0 : vector<32x512xbf16>, vector<32x512xbf16>, vector<32x512xbf16>, vector<32x512xbf16>, vector<32x512xbf16>, vector<32x512xbf16>, vector<32x512xbf16>, vector<32x512xbf16>, vector<32x512xbf16> -> vector<288x512xbf16>
    %c0_16 = arith.constant 0 : index
    %c0_17 = arith.constant 0 : index
    %53 = vector.load %arg4[%c0_16, %c0_17] : memref<32x288xbf16, #tpu.memory_space<vmem>>, vector<32x288xbf16>
    %cst_18 = arith.constant dense<0.000000e+00> : vector<32x512xf32>
    %54 = tpu.matmul %53, %52, %cst_18 {dimension_numbers = #tpu.dot_dimension_numbers<[1], [0], [0], [1], [0, 0, 1, 1], [], []>} : vector<32x288xbf16>, vector<288x512xbf16>, vector<32x512xf32> -> vector<32x512xf32>
    %c0_19 = arith.constant 0 : index
    %c0_20 = arith.constant 0 : index
    %55 = vector.load %arg5[%c0_19, %c0_20] : memref<32x1xf32, #tpu.memory_space<vmem>>, vector<32x1xf32>
    %56 = vector.broadcast %55 : vector<32x1xf32> to vector<32x512xf32>
    %57 = arith.addf %54, %56 : vector<32x512xf32>
    %cst_21 = arith.constant 0.000000e+00 : f32
    %58 = vector.broadcast %cst_21 : f32 to vector<32x512xf32>
    %59 = arith.maximumf %57, %58 : vector<32x512xf32>
    %c0_22 = arith.constant 0 : index
    %c0_23 = arith.constant 0 : index
    %60 = vector.load %arg7[%c0_22, %c0_23] : memref<32x512xf32, #tpu.memory_space<vmem>>, vector<32x512xf32>
    tpu.vector_store %arg7[%c0_22, %c0_23], %59 {strides = array<i32>} : memref<32x512xf32, #tpu.memory_space<vmem>>, vector<32x512xf32>,
    return
  }
  func.func @transform_0(%arg0: i32) -> (i32, i32) {
    %c0_i32 = arith.constant 0 : i32
    %c0_i32_0 = arith.constant 0 : i32
    return %c0_i32, %arg0 : i32, i32
  }
  func.func @transform_1(%arg0: i32) -> (i32, i32) {
    %c0_i32 = arith.constant 0 : i32
    %c0_i32_0 = arith.constant 0 : i32
    %c0_i32_1 = arith.constant 0 : i32
    return %c0_i32, %c0_i32_0 : i32, i32
  }
  func.func @transform_2(%arg0: i32) -> (i32, i32) {
    %c0_i32 = arith.constant 0 : i32
    %c0_i32_0 = arith.constant 0 : i32
    %c0_i32_1 = arith.constant 0 : i32
    return %c0_i32, %c0_i32_0 : i32, i32
  }
  func.func @transform_3(%arg0: i32) -> (i32, i32) {
    %c0_i32 = arith.constant 0 : i32
    %c0_i32_0 = arith.constant 0 : i32
    %c0_i32_1 = arith.constant 0 : i32
    return %c0_i32, %c0_i32_0 : i32, i32
  }
  func.func @transform_4(%arg0: i32) -> (i32, i32) {
    %c0_i32 = arith.constant 0 : i32
    %c0_i32_0 = arith.constant 0 : i32
    %c0_i32_1 = arith.constant 0 : i32
    return %c0_i32, %c0_i32_0 : i32, i32
  }
  func.func @transform_5(%arg0: i32) -> (i32, i32) {
    %c0_i32 = arith.constant 0 : i32
    %c0_i32_0 = arith.constant 0 : i32
    %c0_i32_1 = arith.constant 0 : i32
    return %c0_i32, %c0_i32_0 : i32, i32
  }
  func.func @transform_6(%arg0: i32) -> (i32, i32) {
    %c0_i32 = arith.constant 0 : i32
    %c0_i32_0 = arith.constant 0 : i32
    return %c0_i32, %arg0 : i32, i32
  }
}

</mosaic_0001>

<llo_original>
// kernel: double_conv_forward.1
$region0: #{double_conv_forward.1}
  #allocation0 [shape = 'u32[]', space=smem, size = 0x4, offset = 0x4, fixed_abs, tag = 'smem constant byte address 0x4 - core index']
  #allocation1 [shape = 'u32[72,128]{1,0:T(1,128)}', space=vmem, size = 0x9000, scoped, tag = 'internal scratch']
  %s0 = inlined_call_operand.vmem [shape: bf16[36,512], index: 0, kind: input, shape index: {}]
  %s1 = inlined_call_operand.vmem [shape: bf16[32,36], index: 1, kind: input, shape index: {}]
  %s2 = inlined_call_operand.vmem [shape: f32[32,1], index: 2, kind: input, shape index: {}]
  %s3 = inlined_call_operand.vmem [shape: bf16[32,288], index: 3, kind: input, shape index: {}]
  %s4 = inlined_call_operand.vmem [shape: f32[32,1], index: 4, kind: input, shape index: {}]
  %s5 = inlined_call_operand.vmem [shape: f32[9,512], index: 5, kind: input, shape index: {}]
  %s6 = inlined_call_operand.vmem [shape: f32[32,512], index: 6, kind: output, shape index: {}]
  %s7 = sld [smem:[#allocation0]]
  $region34: #{double_conv_forward.1} parent=0
    _
  %s9 = ssub.s32 1, %s7
  %s10 = scalar_select 0, %s9, %s7
  // Predicated region
  $region2: #{double_conv_forward.1} parent=0 // pred_check
    _
  $region3: #{double_conv_forward.1} parent=0 // pred_check_branch
    %12 = sbr.rel (0) target = $region5
  $region4: #{double_conv_forward.1} parent=0 // pred_region
    _
  $region5: #{double_conv_forward.1} parent=0 // pred_fallthru
    _
  // Predicated region
  $region6: #{double_conv_forward.1} parent=0 // pred_check
    _
  $region7: #{double_conv_forward.1} parent=0 // pred_check_branch
    %14 = sbr.rel (0) target = $region9
  $region8: #{double_conv_forward.1} parent=0 // pred_region
    _
  $region9: #{double_conv_forward.1} parent=0 // pred_fallthru
    _
  // Predicated region
  $region10: #{double_conv_forward.1} parent=0 // pred_check
    _
  $region11: #{double_conv_forward.1} parent=0 // pred_check_branch
    %16 = sbr.rel (0) target = $region13
  $region12: #{double_conv_forward.1} parent=0 // pred_region
    _
  $region13: #{double_conv_forward.1} parent=0 // pred_fallthru
    _
  // Predicated region
  $region14: #{double_conv_forward.1} parent=0 // pred_check
    _
  $region15: #{double_conv_forward.1} parent=0 // pred_check_branch
    %18 = sbr.rel (0) target = $region17
  $region16: #{double_conv_forward.1} parent=0 // pred_region
    _
  $region17: #{double_conv_forward.1} parent=0 // pred_fallthru
    _
  // Predicated region
  $region18: #{double_conv_forward.1} parent=0 // pred_check
    _
  $region19: #{double_conv_forward.1} parent=0 // pred_check_branch
    %20 = sbr.rel (0) target = $region21
  $region20: #{double_conv_forward.1} parent=0 // pred_region
    _
  $region21: #{double_conv_forward.1} parent=0 // pred_fallthru
    _
  // Predicated region
  $region22: #{double_conv_forward.1} parent=0 // pred_check
    _
  $region23: #{double_conv_forward.1} parent=0 // pred_check_branch
    %22 = sbr.rel (0) target = $region25
  $region24: #{double_conv_forward.1} parent=0 // pred_region
    _
  $region25: #{double_conv_forward.1} parent=0 // pred_fallthru
    _
  %v24 = vld [vmem:[%s1] sm:$0xf]
  %v25 = vld [vmem:[%s1 + $0x4] sm:$0xf]
  %v26 = vld [vmem:[%s1 + $0x8] sm:$0xf]
  %v27 = vld [vmem:[%s1 + $0xc] sm:$0xf]
  %v28 = vld [vmem:[%s0] sm:$0xff]
  %v29 = vld [vmem:[%s0 + $0x8] sm:$0xff]
  %v30 = vld [vmem:[%s0 + $0x10] sm:$0xff]
  %v31 = vld [vmem:[%s0 + $0x18] sm:$0xff]
  %v32 = vld [vmem:[%s0 + $0x20] sm:$0xff]
  %v33 = vld [vmem:[%s0 + $0x28] sm:$0xff]
  %v34 = vld [vmem:[%s0 + $0x30] sm:$0xff]
  %v35 = vld [vmem:[%s0 + $0x38] sm:$0xff]
  %v36 = vld [vmem:[%s0 + $0x40] sm:$0x33]
  %v37 = vld [vmem:[%s0 + $0x48] sm:$0x33]
  %v38 = vld [vmem:[%s2] sm:$0xff]
  %v39 = vld [vmem:[%s2 + $0x8] sm:$0xff]
  %v40 = vld [vmem:[%s2 + $0x10] sm:$0xff]
  %v41 = vld [vmem:[%s2 + $0x18] sm:$0xff]
  %43 = vset.pattern.permute.xlu0 0
  %44 = vperm.xlu0 %43, %v38
  %v45 = vpop.permute.xlu0 %44
  %48 = vset.pattern.permute.xlu0 0
  %49 = vperm.xlu0 %48, %v39
  %v50 = vpop.permute.xlu0 %49
  %53 = vset.pattern.permute.xlu0 0
  %54 = vperm.xlu0 %53, %v40
  %v55 = vpop.permute.xlu0 %54
  %58 = vset.pattern.permute.xlu0 0
  %59 = vperm.xlu0 %58, %v41
  %v60 = vpop.permute.xlu0 %59
  %v66 = vunpack.c.l.b16 %v24
  %v67 = vunpack.c.l.b16 %v25
  %v68 = vunpack.c.l.b16 %v26
  %v69 = vunpack.c.l.b16 %v27
  %v70 = vpack.c.b16 %v67, %v66
  %v71 = vpack.c.b16 %v69, %v68
  %v82 = vunpack.c.l.b16 %v28
  %v83 = vunpack.c.h.b16 %v28
  %v84 = vunpack.c.l.b16 %v29
  %v85 = vunpack.c.h.b16 %v29
  %v86 = vunpack.c.l.b16 %v30
  %v87 = vunpack.c.h.b16 %v30
  %v88 = vunpack.c.l.b16 %v31
  %v89 = vunpack.c.h.b16 %v31
  %v90 = vunpack.c.l.b16 %v32
  %v91 = vunpack.c.h.b16 %v32
  %v92 = vunpack.c.l.b16 %v33
  %v93 = vunpack.c.h.b16 %v33
  %v94 = vunpack.c.l.b16 %v34
  %v95 = vunpack.c.h.b16 %v34
  %v96 = vunpack.c.l.b16 %v35
  %v97 = vunpack.c.h.b16 %v35
  %v98 = vunpack.c.l.b16 %v36
  %v99 = vunpack.c.h.b16 %v36
  %v100 = vunpack.c.l.b16 %v37
  %v101 = vunpack.c.h.b16 %v37
  %v102 = vpack.c.b16 %v86, %v82
  %v103 = vpack.c.b16 %v87, %v83
  %v104 = vpack.c.b16 %v88, %v84
  %v105 = vpack.c.b16 %v89, %v85
  %v106 = vpack.c.b16 %v94, %v90
  %v107 = vpack.c.b16 %v95, %v91
  %v108 = vpack.c.b16 %v96, %v92
  %v109 = vpack.c.b16 %v97, %v93
  %v110 = vpack.c.b16 %v98, %v98
  %v111 = vpack.c.b16 %v99, %v99
  %v112 = vpack.c.b16 %v100, %v100
  %v113 = vpack.c.b16 %v101, %v101
  %vm122 = vcmask 293888
  %v124 = vsel %vm122, %v70, 0
  %v127 = vsel %vm122, %v71, 0
  %vm129 = vcmask 1041408
  %v131 = vsel %vm129, %v110, 0
  %v134 = vsel %vm129, %v111, 0
  %v137 = vsel %vm129, %v112, 0
  %v140 = vsel %vm129, %v113, 0
  %142 = vmatpush.bf16.msra.mxu0 0
  %143 = vmatpush.bf16.msra.mxu0 0
  %144 = vmatpush.bf16.msra.mxu0 0
  %145 = vmatpush.bf16.msra.mxu0 0
  %146 = vmatpush.bf16.msra.mxu0 0
  %147 = vmatpush.bf16.msra.mxu0 %v131
  %148 = vmatpush.bf16.msra.mxu0 %v106
  %149 = vmatpush.bf16.msra.mxu0 %v102
  %150 = vmatmul.bf16.gmra.mxu0 %v124
  %v151 = vpop.f32.mrf.mxu0
  %v152 = vadd.f32 %v45, %v151
  %v153 = vpop.f32.mrf.mxu0
  %v154 = vadd.f32 %v50, %v153
  %155 = vmatmul.bf16.gmra.mxu0 %v127
  %v156 = vpop.f32.mrf.mxu0
  %v157 = vadd.f32 %v55, %v156
  %v158 = vpop.f32.mrf.mxu0
  %v159 = vadd.f32 %v60, %v158
  %160 = vdwg.mxu0
  %161 = vmatpush.bf16.msra.mxu0 0
  %162 = vmatpush.bf16.msra.mxu0 0
  %163 = vmatpush.bf16.msra.mxu0 0
  %164 = vmatpush.bf16.msra.mxu0 0
  %165 = vmatpush.bf16.msra.mxu0 0
  %166 = vmatpush.bf16.msra.mxu0 %v134
  %167 = vmatpush.bf16.msra.mxu0 %v107
  %168 = vmatpush.bf16.msra.mxu0 %v103
  %169 = vmatmul.bf16.gmra.mxu0 %v124
  %v170 = vpop.f32.mrf.mxu0
  %v171 = vadd.f32 %v45, %v170
  %v172 = vpop.f32.mrf.mxu0
  %v173 = vadd.f32 %v50, %v172
  %174 = vmatmul.bf16.gmra.mxu0 %v127
  %v175 = vpop.f32.mrf.mxu0
  %v176 = vadd.f32 %v55, %v175
  %v177 = vpop.f32.mrf.mxu0
  %v178 = vadd.f32 %v60, %v177
  %179 = vdwg.mxu0
  %180 = vmatpush.bf16.msra.mxu0 0
  %181 = vmatpush.bf16.msra.mxu0 0
  %182 = vmatpush.bf16.msra.mxu0 0
  %183 = vmatpush.bf16.msra.mxu0 0
  %184 = vmatpush.bf16.msra.mxu0 0
  %185 = vmatpush.bf16.msra.mxu0 %v137
  %186 = vmatpush.bf16.msra.mxu0 %v108
  %187 = vmatpush.bf16.msra.mxu0 %v104
  %188 = vmatmul.bf16.gmra.mxu0 %v124
  %v189 = vpop.f32.mrf.mxu0
  %v190 = vadd.f32 %v45, %v189
  %v191 = vpop.f32.mrf.mxu0
  %v192 = vadd.f32 %v50, %v191
  %193 = vmatmul.bf16.gmra.mxu0 %v127
  %v194 = vpop.f32.mrf.mxu0
  %v195 = vadd.f32 %v55, %v194
  %v196 = vpop.f32.mrf.mxu0
  %v197 = vadd.f32 %v60, %v196
  %198 = vdwg.mxu0
  %199 = vmatpush.bf16.msra.mxu0 0
  %200 = vmatpush.bf16.msra.mxu0 0
  %201 = vmatpush.bf16.msra.mxu0 0
  %202 = vmatpush.bf16.msra.mxu0 0
  %203 = vmatpush.bf16.msra.mxu0 0
  %204 = vmatpush.bf16.msra.mxu0 %v140
  %205 = vmatpush.bf16.msra.mxu0 %v109
  %206 = vmatpush.bf16.msra.mxu0 %v105
  %207 = vmatmul.bf16.gmra.mxu0 %v124
  %v208 = vpop.f32.mrf.mxu0
  %v209 = vadd.f32 %v45, %v208
  %v210 = vpop.f32.mrf.mxu0
  %v211 = vadd.f32 %v50, %v210
  %212 = vmatmul.bf16.gmra.mxu0 %v127
  %v213 = vpop.f32.mrf.mxu0
  %v214 = vadd.f32 %v55, %v213
  %v215 = vpop.f32.mrf.mxu0
  %v216 = vadd.f32 %v60, %v215
  %217 = vdwg.mxu0
  %v218 = vmax.f32 %v152, 0.0
  %v219 = vmax.f32 %v171, 0.0
  %v220 = vmax.f32 %v190, 0.0
  %v221 = vmax.f32 %v209, 0.0
  %v222 = vmax.f32 %v154, 0.0
  %v223 = vmax.f32 %v173, 0.0
  %v224 = vmax.f32 %v192, 0.0
  %v225 = vmax.f32 %v211, 0.0
  %v226 = vmax.f32 %v157, 0.0
  %v227 = vmax.f32 %v176, 0.0
  %v228 = vmax.f32 %v195, 0.0
  %v229 = vmax.f32 %v214, 0.0
  %v230 = vmax.f32 %v159, 0.0
  %v231 = vmax.f32 %v178, 0.0
  %v232 = vmax.f32 %v197, 0.0
  %v233 = vmax.f32 %v216, 0.0
  %234 = vrot.lane.b32.xlu0 %v218, 17
  %v235 = vpop.permute.xlu0 %234
  %236 = vrot.lane.b32.xlu0 %v222, 17
  %v237 = vpop.permute.xlu0 %236
  %238 = vrot.lane.b32.xlu0 %v226, 17
  %v239 = vpop.permute.xlu0 %238
  %240 = vrot.lane.b32.xlu0 %v230, 17
  %v241 = vpop.permute.xlu0 %240
  %242 = vrot.lane.b32.xlu0 %v219, 17
  %v243 = vpop.permute.xlu0 %242
  %244 = vrot.lane.b32.xlu0 %v223, 17
  %v245 = vpop.permute.xlu0 %244
  %246 = vrot.lane.b32.xlu0 %v227, 17
  %v247 = vpop.permute.xlu0 %246
  %248 = vrot.lane.b32.xlu0 %v231, 17
  %v249 = vpop.permute.xlu0 %248
  %250 = vrot.lane.b32.xlu0 %v220, 17
  %v251 = vpop.permute.xlu0 %250
  %252 = vrot.lane.b32.xlu0 %v224, 17
  %v253 = vpop.permute.xlu0 %252
  %254 = vrot.lane.b32.xlu0 %v228, 17
  %v255 = vpop.permute.xlu0 %254
  %256 = vrot.lane.b32.xlu0 %v232, 17
  %v257 = vpop.permute.xlu0 %256
  %258 = vrot.lane.b32.xlu0 %v221, 17
  %v259 = vpop.permute.xlu0 %258
  %260 = vrot.lane.b32.xlu0 %v225, 17
  %v261 = vpop.permute.xlu0 %260
  %262 = vrot.lane.b32.xlu0 %v229, 17
  %v263 = vpop.permute.xlu0 %262
  %264 = vrot.lane.b32.xlu0 %v233, 17
  %v265 = vpop.permute.xlu0 %264
  %v266 = vlaneseq
  %v267 = vand.u32 %v266, 127
  %vm268 = vcmp.lt.s32.totalorder %v267, 17
  %v269 = vsel %vm268, %v251, %v259
  %v270 = vsel %vm268, %v253, %v261
  %v271 = vsel %vm268, %v255, %v263
  %v272 = vsel %vm268, %v257, %v265
  %v273 = vsel %vm268, %v243, %v251
  %v274 = vsel %vm268, %v245, %v253
  %v275 = vsel %vm268, %v247, %v255
  %v276 = vsel %vm268, %v249, %v257
  %v277 = vsel %vm268, %v235, %v243
  %v278 = vsel %vm268, %v237, %v245
  %v279 = vsel %vm268, %v239, %v247
  %v280 = vsel %vm268, %v241, %v249
  %v281 = vsel %vm268, %v259, %v235
  %v282 = vsel %vm268, %v261, %v237
  %v283 = vsel %vm268, %v263, %v239
  %v284 = vsel %vm268, %v265, %v241
  %v285 = vld [vmem:[%s5] ss:$8 sm:$0xf]
  %v287 = vperm.slane %v285, 0
  %v288 = vperm.slane %v285, 1
  %v289 = vperm.slane %v285, 2
  %v290 = vperm.slane %v285, 3
  %v295 = vmul.f32 %v281, %v287
  %v296 = vmul.f32 %v277, %v288
  %v297 = vmul.f32 %v273, %v289
  %v298 = vmul.f32 %v269, %v290
  %v299 = vmul.f32 %v282, %v287
  %v300 = vmul.f32 %v278, %v288
  %v301 = vmul.f32 %v274, %v289
  %v302 = vmul.f32 %v270, %v290
  %v303 = vmul.f32 %v283, %v287
  %v304 = vmul.f32 %v279, %v288
  %v305 = vmul.f32 %v275, %v289
  %v306 = vmul.f32 %v271, %v290
  %v307 = vmul.f32 %v284, %v287
  %v308 = vmul.f32 %v280, %v288
  %v309 = vmul.f32 %v276, %v289
  %v310 = vmul.f32 %v272, %v290
  %v311 = vpack.c.bf16 %v296, %v295
  %v312 = vpack.c.bf16 %v298, %v297
  %v313 = vpack.c.bf16 %v300, %v299
  %v314 = vpack.c.bf16 %v302, %v301
  %v315 = vpack.c.bf16 %v304, %v303
  %v316 = vpack.c.bf16 %v306, %v305
  %v317 = vpack.c.bf16 %v308, %v307
  %v318 = vpack.c.bf16 %v310, %v309
  %319 = vrot.lane.b32.xlu0 %v218, 16
  %v320 = vpop.permute.xlu0 %319
  %321 = vrot.lane.b32.xlu0 %v222, 16
  %v322 = vpop.permute.xlu0 %321
  %323 = vrot.lane.b32.xlu0 %v226, 16
  %v324 = vpop.permute.xlu0 %323
  %325 = vrot.lane.b32.xlu0 %v230, 16
  %v326 = vpop.permute.xlu0 %325
  %327 = vrot.lane.b32.xlu0 %v219, 16
  %v328 = vpop.permute.xlu0 %327
  %329 = vrot.lane.b32.xlu0 %v223, 16
  %v330 = vpop.permute.xlu0 %329
  %331 = vrot.lane.b32.xlu0 %v227, 16
  %v332 = vpop.permute.xlu0 %331
  %333 = vrot.lane.b32.xlu0 %v231, 16
  %v334 = vpop.permute.xlu0 %333
  %335 = vrot.lane.b32.xlu0 %v220, 16
  %v336 = vpop.permute.xlu0 %335
  %337 = vrot.lane.b32.xlu0 %v224, 16
  %v338 = vpop.permute.xlu0 %337
  %339 = vrot.lane.b32.xlu0 %v228, 16
  %v340 = vpop.permute.xlu0 %339
  %341 = vrot.lane.b32.xlu0 %v232, 16
  %v342 = vpop.permute.xlu0 %341
  %343 = vrot.lane.b32.xlu0 %v221, 16
  %v344 = vpop.permute.xlu0 %343
  %345 = vrot.lane.b32.xlu0 %v225, 16
  %v346 = vpop.permute.xlu0 %345
  %347 = vrot.lane.b32.xlu0 %v229, 16
  %v348 = vpop.permute.xlu0 %347
  %349 = vrot.lane.b32.xlu0 %v233, 16
  %v350 = vpop.permute.xlu0 %349
  %vm351 = vcmp.lt.s32.totalorder %v267, 16
  %v352 = vsel %vm351, %v336, %v344
  %v353 = vsel %vm351, %v338, %v346
  %v354 = vsel %vm351, %v340, %v348
  %v355 = vsel %vm351, %v342, %v350
  %v356 = vsel %vm351, %v328, %v336
  %v357 = vsel %vm351, %v330, %v338
  %v358 = vsel %vm351, %v332, %v340
  %v359 = vsel %vm351, %v334, %v342
  %v360 = vsel %vm351, %v320, %v328
  %v361 = vsel %vm351, %v322, %v330
  %v362 = vsel %vm351, %v324, %v332
  %v363 = vsel %vm351, %v326, %v334
  %v364 = vsel %vm351, %v344, %v320
  %v365 = vsel %vm351, %v346, %v322
  %v366 = vsel %vm351, %v348, %v324
  %v367 = vsel %vm351, %v350, %v326
  %s368 = scalar_lea.vmem %s5, 1
  %v369 = vld [vmem:[%s368] ss:$8 sm:$0xf]
  %v371 = vperm.slane %v369, 0
  %v372 = vperm.slane %v369, 1
  %v373 = vperm.slane %v369, 2
  %v374 = vperm.slane %v369, 3
  %v379 = vmul.f32 %v364, %v371
  %v380 = vmul.f32 %v360, %v372
  %v381 = vmul.f32 %v356, %v373
  %v382 = vmul.f32 %v352, %v374
  %v383 = vmul.f32 %v365, %v371
  %v384 = vmul.f32 %v361, %v372
  %v385 = vmul.f32 %v357, %v373
  %v386 = vmul.f32 %v353, %v374
  %v387 = vmul.f32 %v366, %v371
  %v388 = vmul.f32 %v362, %v372
  %v389 = vmul.f32 %v358, %v373
  %v390 = vmul.f32 %v354, %v374
  %v391 = vmul.f32 %v367, %v371
  %v392 = vmul.f32 %v363, %v372
  %v393 = vmul.f32 %v359, %v373
  %v394 = vmul.f32 %v355, %v374
  %v395 = vpack.c.bf16 %v380, %v379
  %v396 = vpack.c.bf16 %v382, %v381
  %v397 = vpack.c.bf16 %v384, %v383
  %v398 = vpack.c.bf16 %v386, %v385
  %v399 = vpack.c.bf16 %v388, %v387
  %v400 = vpack.c.bf16 %v390, %v389
  %v401 = vpack.c.bf16 %v392, %v391
  %v402 = vpack.c.bf16 %v394, %v393
  %403 = vrot.lane.b32.xlu0 %v218, 15
  %v404 = vpop.permute.xlu0 %403
  %405 = vrot.lane.b32.xlu0 %v222, 15
  %v406 = vpop.permute.xlu0 %405
  %407 = vrot.lane.b32.xlu0 %v226, 15
  %v408 = vpop.permute.xlu0 %407
  %409 = vrot.lane.b32.xlu0 %v230, 15
  %v410 = vpop.permute.xlu0 %409
  %411 = vrot.lane.b32.xlu0 %v219, 15
  %v412 = vpop.permute.xlu0 %411
  %413 = vrot.lane.b32.xlu0 %v223, 15
  %v414 = vpop.permute.xlu0 %413
  %415 = vrot.lane.b32.xlu0 %v227, 15
  %v416 = vpop.permute.xlu0 %415
  %417 = vrot.lane.b32.xlu0 %v231, 15
  %v418 = vpop.permute.xlu0 %417
  %419 = vrot.lane.b32.xlu0 %v220, 15
  %v420 = vpop.permute.xlu0 %419
  %421 = vrot.lane.b32.xlu0 %v224, 15
  %v422 = vpop.permute.xlu0 %421
  %423 = vrot.lane.b32.xlu0 %v228, 15
  %v424 = vpop.permute.xlu0 %423
  %425 = vrot.lane.b32.xlu0 %v232, 15
  %v426 = vpop.permute.xlu0 %425
  %427 = vrot.lane.b32.xlu0 %v221, 15
  %v428 = vpop.permute.xlu0 %427
  %429 = vrot.lane.b32.xlu0 %v225, 15
  %v430 = vpop.permute.xlu0 %429
  %431 = vrot.lane.b32.xlu0 %v229, 15
  %v432 = vpop.permute.xlu0 %431
  %433 = vrot.lane.b32.xlu0 %v233, 15
  %v434 = vpop.permute.xlu0 %433
  %vm435 = vcmp.lt.s32.totalorder %v267, 15
  %v436 = vsel %vm435, %v420, %v428
  %v437 = vsel %vm435, %v422, %v430
  %v438 = vsel %vm435, %v424, %v432
  %v439 = vsel %vm435, %v426, %v434
  %v440 = vsel %vm435, %v412, %v420
  %v441 = vsel %vm435, %v414, %v422
  %v442 = vsel %vm435, %v416, %v424
  %v443 = vsel %vm435, %v418, %v426
  %v444 = vsel %vm435, %v404, %v412
  %v445 = vsel %vm435, %v406, %v414
  %v446 = vsel %vm435, %v408, %v416
  %v447 = vsel %vm435, %v410, %v418
  %v448 = vsel %vm435, %v428, %v404
  %v449 = vsel %vm435, %v430, %v406
  %v450 = vsel %vm435, %v432, %v408
  %v451 = vsel %vm435, %v434, %v410
  %s452 = scalar_lea.vmem %s5, 2
  %v453 = vld [vmem:[%s452] ss:$8 sm:$0xf]
  %v455 = vperm.slane %v453, 0
  %v456 = vperm.slane %v453, 1
  %v457 = vperm.slane %v453, 2
  %v458 = vperm.slane %v453, 3
  %v463 = vmul.f32 %v448, %v455
  %v464 = vmul.f32 %v444, %v456
  %v465 = vmul.f32 %v440, %v457
  %v466 = vmul.f32 %v436, %v458
  %v467 = vmul.f32 %v449, %v455
  %v468 = vmul.f32 %v445, %v456
  %v469 = vmul.f32 %v441, %v457
  %v470 = vmul.f32 %v437, %v458
  %v471 = vmul.f32 %v450, %v455
  %v472 = vmul.f32 %v446, %v456
  %v473 = vmul.f32 %v442, %v457
  %v474 = vmul.f32 %v438, %v458
  %v475 = vmul.f32 %v451, %v455
  %v476 = vmul.f32 %v447, %v456
  %v477 = vmul.f32 %v443, %v457
  %v478 = vmul.f32 %v439, %v458
  %v479 = vpack.c.bf16 %v464, %v463
  %v480 = vpack.c.bf16 %v466, %v465
  %v481 = vpack.c.bf16 %v468, %v467
  %v482 = vpack.c.bf16 %v470, %v469
  %v483 = vpack.c.bf16 %v472, %v471
  %v484 = vpack.c.bf16 %v474, %v473
  %v485 = vpack.c.bf16 %v476, %v475
  %v486 = vpack.c.bf16 %v478, %v477
  %487 = vrot.lane.b32.xlu0 %v218, 1
  %v488 = vpop.permute.xlu0 %487
  %489 = vrot.lane.b32.xlu0 %v222, 1
  %v490 = vpop.permute.xlu0 %489
  %491 = vrot.lane.b32.xlu0 %v226, 1
  %v492 = vpop.permute.xlu0 %491
  %493 = vrot.lane.b32.xlu0 %v230, 1
  %v494 = vpop.permute.xlu0 %493
  %495 = vrot.lane.b32.xlu0 %v219, 1
  %v496 = vpop.permute.xlu0 %495
  %497 = vrot.lane.b32.xlu0 %v223, 1
  %v498 = vpop.permute.xlu0 %497
  %499 = vrot.lane.b32.xlu0 %v227, 1
  %v500 = vpop.permute.xlu0 %499
  %501 = vrot.lane.b32.xlu0 %v231, 1
  %v502 = vpop.permute.xlu0 %501
  %503 = vrot.lane.b32.xlu0 %v220, 1
  %v504 = vpop.permute.xlu0 %503
  %505 = vrot.lane.b32.xlu0 %v224, 1
  %v506 = vpop.permute.xlu0 %505
  %507 = vrot.lane.b32.xlu0 %v228, 1
  %v508 = vpop.permute.xlu0 %507
  %509 = vrot.lane.b32.xlu0 %v232, 1
  %v510 = vpop.permute.xlu0 %509
  %511 = vrot.lane.b32.xlu0 %v221, 1
  %v512 = vpop.permute.xlu0 %511
  %513 = vrot.lane.b32.xlu0 %v225, 1
  %v514 = vpop.permute.xlu0 %513
  %515 = vrot.lane.b32.xlu0 %v229, 1
  %v516 = vpop.permute.xlu0 %515
  %517 = vrot.lane.b32.xlu0 %v233, 1
  %v518 = vpop.permute.xlu0 %517
  %vm519 = vcmp.lt.s32.totalorder %v267, 1
  %v520 = vsel %vm519, %v504, %v512
  %v521 = vsel %vm519, %v506, %v514
  %v522 = vsel %vm519, %v508, %v516
  %v523 = vsel %vm519, %v510, %v518
  %v524 = vsel %vm519, %v496, %v504
  %v525 = vsel %vm519, %v498, %v506
  %v526 = vsel %vm519, %v500, %v508
  %v527 = vsel %vm519, %v502, %v510
  %v528 = vsel %vm519, %v488, %v496
  %v529 = vsel %vm519, %v490, %v498
  %v530 = vsel %vm519, %v492, %v500
  %v531 = vsel %vm519, %v494, %v502
  %v532 = vsel %vm519, %v512, %v488
  %v533 = vsel %vm519, %v514, %v490
  %v534 = vsel %vm519, %v516, %v492
  %v535 = vsel %vm519, %v518, %v494
  %s536 = scalar_lea.vmem %s5, 3
  %v537 = vld [vmem:[%s536] ss:$8 sm:$0xf]
  %v539 = vperm.slane %v537, 0
  %v540 = vperm.slane %v537, 1
  %v541 = vperm.slane %v537, 2
  %v542 = vperm.slane %v537, 3
  %v547 = vmul.f32 %v532, %v539
  %v548 = vmul.f32 %v528, %v540
  %v549 = vmul.f32 %v524, %v541
  %v550 = vmul.f32 %v520, %v542
  %v551 = vmul.f32 %v533, %v539
  %v552 = vmul.f32 %v529, %v540
  %v553 = vmul.f32 %v525, %v541
  %v554 = vmul.f32 %v521, %v542
  %v555 = vmul.f32 %v534, %v539
  %v556 = vmul.f32 %v530, %v540
  %v557 = vmul.f32 %v526, %v541
  %v558 = vmul.f32 %v522, %v542
  %v559 = vmul.f32 %v535, %v539
  %v560 = vmul.f32 %v531, %v540
  %v561 = vmul.f32 %v527, %v541
  %v562 = vmul.f32 %v523, %v542
  %v563 = vpack.c.bf16 %v548, %v547
  %v564 = vpack.c.bf16 %v550, %v549
  %v565 = vpack.c.bf16 %v552, %v551
  %v566 = vpack.c.bf16 %v554, %v553
  %v567 = vpack.c.bf16 %v556, %v555
  %v568 = vpack.c.bf16 %v558, %v557
  %v569 = vpack.c.bf16 %v560, %v559
  %v570 = vpack.c.bf16 %v562, %v561
  %s571 = scalar_lea.vmem %s5, 4
  %v572 = vld [vmem:[%s571] ss:$8 sm:$0xf]
  %v574 = vperm.slane %v572, 0
  %v575 = vperm.slane %v572, 1
  %v576 = vperm.slane %v572, 2
  %v577 = vperm.slane %v572, 3
  %v582 = vmul.f32 %v218, %v574
  %v583 = vmul.f32 %v219, %v575
  %v584 = vmul.f32 %v220, %v576
  %v585 = vmul.f32 %v221, %v577
  %v586 = vmul.f32 %v222, %v574
  %v587 = vmul.f32 %v223, %v575
  %v588 = vmul.f32 %v224, %v576
  %v589 = vmul.f32 %v225, %v577
  %v590 = vmul.f32 %v226, %v574
  %v591 = vmul.f32 %v227, %v575
  %v592 = vmul.f32 %v228, %v576
  %v593 = vmul.f32 %v229, %v577
  %v594 = vmul.f32 %v230, %v574
  %v595 = vmul.f32 %v231, %v575
  %v596 = vmul.f32 %v232, %v576
  %v597 = vmul.f32 %v233, %v577
  %v598 = vpack.c.bf16 %v583, %v582
  %v599 = vpack.c.bf16 %v585, %v584
  %v600 = vpack.c.bf16 %v587, %v586
  %v601 = vpack.c.bf16 %v589, %v588
  %v602 = vpack.c.bf16 %v591, %v590
  %v603 = vpack.c.bf16 %v593, %v592
  %v604 = vpack.c.bf16 %v595, %v594
  %v605 = vpack.c.bf16 %v597, %v596
  %606 = vrot.lane.b32.xlu0 %v218, 127
  %v607 = vpop.permute.xlu0 %606
  %608 = vrot.lane.b32.xlu0 %v222, 127
  %v609 = vpop.permute.xlu0 %608
  %610 = vrot.lane.b32.xlu0 %v226, 127
  %v611 = vpop.permute.xlu0 %610
  %612 = vrot.lane.b32.xlu0 %v230, 127
  %v613 = vpop.permute.xlu0 %612
  %614 = vrot.lane.b32.xlu0 %v219, 127
  %v615 = vpop.permute.xlu0 %614
  %616 = vrot.lane.b32.xlu0 %v223, 127
  %v617 = vpop.permute.xlu0 %616
  %618 = vrot.lane.b32.xlu0 %v227, 127
  %v619 = vpop.permute.xlu0 %618
  %620 = vrot.lane.b32.xlu0 %v231, 127
  %v621 = vpop.permute.xlu0 %620
  %622 = vrot.lane.b32.xlu0 %v220, 127
  %v623 = vpop.permute.xlu0 %622
  %624 = vrot.lane.b32.xlu0 %v224, 127
  %v625 = vpop.permute.xlu0 %624
  %626 = vrot.lane.b32.xlu0 %v228, 127
  %v627 = vpop.permute.xlu0 %626
  %628 = vrot.lane.b32.xlu0 %v232, 127
  %v629 = vpop.permute.xlu0 %628
  %630 = vrot.lane.b32.xlu0 %v221, 127
  %v631 = vpop.permute.xlu0 %630
  %632 = vrot.lane.b32.xlu0 %v225, 127
  %v633 = vpop.permute.xlu0 %632
  %634 = vrot.lane.b32.xlu0 %v229, 127
  %v635 = vpop.permute.xlu0 %634
  %636 = vrot.lane.b32.xlu0 %v233, 127
  %v637 = vpop.permute.xlu0 %636
  %vm638 = vcmp.lt.s32.totalorder %v267, 127
  %v639 = vsel %vm638, %v623, %v631
  %v640 = vsel %vm638, %v625, %v633
  %v641 = vsel %vm638, %v627, %v635
  %v642 = vsel %vm638, %v629, %v637
  %v643 = vsel %vm638, %v615, %v623
  %v644 = vsel %vm638, %v617, %v625
  %v645 = vsel %vm638, %v619, %v627
  %v646 = vsel %vm638, %v621, %v629
  %v647 = vsel %vm638, %v607, %v615
  %v648 = vsel %vm638, %v609, %v617
  %v649 = vsel %vm638, %v611, %v619
  %v650 = vsel %vm638, %v613, %v621
  %v651 = vsel %vm638, %v631, %v607
  %v652 = vsel %vm638, %v633, %v609
  %v653 = vsel %vm638, %v635, %v611
  %v654 = vsel %vm638, %v637, %v613
  %s655 = scalar_lea.vmem %s5, 5
  %v656 = vld [vmem:[%s655] ss:$8 sm:$0xf]
  %v658 = vperm.slane %v656, 0
  %v659 = vperm.slane %v656, 1
  %v660 = vperm.slane %v656, 2
  %v661 = vperm.slane %v656, 3
  %v666 = vmul.f32 %v647, %v658
  %v667 = vmul.f32 %v643, %v659
  %v668 = vmul.f32 %v639, %v660
  %v669 = vmul.f32 %v651, %v661
  %v670 = vmul.f32 %v648, %v658
  %v671 = vmul.f32 %v644, %v659
  %v672 = vmul.f32 %v640, %v660
  %v673 = vmul.f32 %v652, %v661
  %v674 = vmul.f32 %v649, %v658
  %v675 = vmul.f32 %v645, %v659
  %v676 = vmul.f32 %v641, %v660
  %v677 = vmul.f32 %v653, %v661
  %v678 = vmul.f32 %v650, %v658
  %v679 = vmul.f32 %v646, %v659
  %v680 = vmul.f32 %v642, %v660
  %v681 = vmul.f32 %v654, %v661
  %v682 = vpack.c.bf16 %v667, %v666
  %v683 = vpack.c.bf16 %v669, %v668
  %v684 = vpack.c.bf16 %v671, %v670
  %v685 = vpack.c.bf16 %v673, %v672
  %v686 = vpack.c.bf16 %v675, %v674
  %v687 = vpack.c.bf16 %v677, %v676
  %v688 = vpack.c.bf16 %v679, %v678
  %v689 = vpack.c.bf16 %v681, %v680
  %690 = vrot.lane.b32.xlu0 %v218, 113
  %v691 = vpop.permute.xlu0 %690
  %692 = vrot.lane.b32.xlu0 %v222, 113
  %v693 = vpop.permute.xlu0 %692
  %694 = vrot.lane.b32.xlu0 %v226, 113
  %v695 = vpop.permute.xlu0 %694
  %696 = vrot.lane.b32.xlu0 %v230, 113
  %v697 = vpop.permute.xlu0 %696
  %698 = vrot.lane.b32.xlu0 %v219, 113
  %v699 = vpop.permute.xlu0 %698
  %700 = vrot.lane.b32.xlu0 %v223, 113
  %v701 = vpop.permute.xlu0 %700
  %702 = vrot.lane.b32.xlu0 %v227, 113
  %v703 = vpop.permute.xlu0 %702
  %704 = vrot.lane.b32.xlu0 %v231, 113
  %v705 = vpop.permute.xlu0 %704
  %706 = vrot.lane.b32.xlu0 %v220, 113
  %v707 = vpop.permute.xlu0 %706
  %708 = vrot.lane.b32.xlu0 %v224, 113
  %v709 = vpop.permute.xlu0 %708
  %710 = vrot.lane.b32.xlu0 %v228, 113
  %v711 = vpop.permute.xlu0 %710
  %712 = vrot.lane.b32.xlu0 %v232, 113
  %v713 = vpop.permute.xlu0 %712
  %714 = vrot.lane.b32.xlu0 %v221, 113
  %v715 = vpop.permute.xlu0 %714
  %716 = vrot.lane.b32.xlu0 %v225, 113
  %v717 = vpop.permute.xlu0 %716
  %718 = vrot.lane.b32.xlu0 %v229, 113
  %v719 = vpop.permute.xlu0 %718
  %720 = vrot.lane.b32.xlu0 %v233, 113
  %v721 = vpop.permute.xlu0 %720
  %vm722 = vcmp.lt.s32.totalorder %v267, 113
  %v723 = vsel %vm722, %v707, %v715
  %v724 = vsel %vm722, %v709, %v717
  %v725 = vsel %vm722, %v711, %v719
  %v726 = vsel %vm722, %v713, %v721
  %v727 = vsel %vm722, %v699, %v707
  %v728 = vsel %vm722, %v701, %v709
  %v729 = vsel %vm722, %v703, %v711
  %v730 = vsel %vm722, %v705, %v713
  %v731 = vsel %vm722, %v691, %v699
  %v732 = vsel %vm722, %v693, %v701
  %v733 = vsel %vm722, %v695, %v703
  %v734 = vsel %vm722, %v697, %v705
  %v735 = vsel %vm722, %v715, %v691
  %v736 = vsel %vm722, %v717, %v693
  %v737 = vsel %vm722, %v719, %v695
  %v738 = vsel %vm722, %v721, %v697
  %s739 = scalar_lea.vmem %s5, 6
  %v740 = vld [vmem:[%s739] ss:$8 sm:$0xf]
  %v742 = vperm.slane %v740, 0
  %v743 = vperm.slane %v740, 1
  %v744 = vperm.slane %v740, 2
  %v745 = vperm.slane %v740, 3
  %v750 = vmul.f32 %v731, %v742
  %v751 = vmul.f32 %v727, %v743
  %v752 = vmul.f32 %v723, %v744
  %v753 = vmul.f32 %v735, %v745
  %v754 = vmul.f32 %v732, %v742
  %v755 = vmul.f32 %v728, %v743
  %v756 = vmul.f32 %v724, %v744
  %v757 = vmul.f32 %v736, %v745
  %v758 = vmul.f32 %v733, %v742
  %v759 = vmul.f32 %v729, %v743
  %v760 = vmul.f32 %v725, %v744
  %v761 = vmul.f32 %v737, %v745
  %v762 = vmul.f32 %v734, %v742
  %v763 = vmul.f32 %v730, %v743
  %v764 = vmul.f32 %v726, %v744
  %v765 = vmul.f32 %v738, %v745
  %v766 = vpack.c.bf16 %v751, %v750
  %v767 = vpack.c.bf16 %v753, %v752
  %v768 = vpack.c.bf16 %v755, %v754
  %v769 = vpack.c.bf16 %v757, %v756
  %v770 = vpack.c.bf16 %v759, %v758
  %v771 = vpack.c.bf16 %v761, %v760
  %v772 = vpack.c.bf16 %v763, %v762
  %v773 = vpack.c.bf16 %v765, %v764
  %774 = vrot.lane.b32.xlu0 %v218, 112
  %v775 = vpop.permute.xlu0 %774
  %776 = vrot.lane.b32.xlu0 %v222, 112
  %v777 = vpop.permute.xlu0 %776
  %778 = vrot.lane.b32.xlu0 %v226, 112
  %v779 = vpop.permute.xlu0 %778
  %780 = vrot.lane.b32.xlu0 %v230, 112
  %v781 = vpop.permute.xlu0 %780
  %782 = vrot.lane.b32.xlu0 %v219, 112
  %v783 = vpop.permute.xlu0 %782
  %784 = vrot.lane.b32.xlu0 %v223, 112
  %v785 = vpop.permute.xlu0 %784
  %786 = vrot.lane.b32.xlu0 %v227, 112
  %v787 = vpop.permute.xlu0 %786
  %788 = vrot.lane.b32.xlu0 %v231, 112
  %v789 = vpop.permute.xlu0 %788
  %790 = vrot.lane.b32.xlu0 %v220, 112
  %v791 = vpop.permute.xlu0 %790
  %792 = vrot.lane.b32.xlu0 %v224, 112
  %v793 = vpop.permute.xlu0 %792
  %794 = vrot.lane.b32.xlu0 %v228, 112
  %v795 = vpop.permute.xlu0 %794
  %796 = vrot.lane.b32.xlu0 %v232, 112
  %v797 = vpop.permute.xlu0 %796
  %798 = vrot.lane.b32.xlu0 %v221, 112
  %v799 = vpop.permute.xlu0 %798
  %800 = vrot.lane.b32.xlu0 %v225, 112
  %v801 = vpop.permute.xlu0 %800
  %802 = vrot.lane.b32.xlu0 %v229, 112
  %v803 = vpop.permute.xlu0 %802
  %804 = vrot.lane.b32.xlu0 %v233, 112
  %v805 = vpop.permute.xlu0 %804
  %vm806 = vcmp.lt.s32.totalorder %v267, 112
  %v807 = vsel %vm806, %v791, %v799
  %v808 = vsel %vm806, %v793, %v801
  %v809 = vsel %vm806, %v795, %v803
  %v810 = vsel %vm806, %v797, %v805
  %v811 = vsel %vm806, %v783, %v791
  %v812 = vsel %vm806, %v785, %v793
  %v813 = vsel %vm806, %v787, %v795
  %v814 = vsel %vm806, %v789, %v797
  %v815 = vsel %vm806, %v775, %v783
  %v816 = vsel %vm806, %v777, %v785
  %v817 = vsel %vm806, %v779, %v787
  %v818 = vsel %vm806, %v781, %v789
  %v819 = vsel %vm806, %v799, %v775
  %v820 = vsel %vm806, %v801, %v777
  %v821 = vsel %vm806, %v803, %v779
  %v822 = vsel %vm806, %v805, %v781
  %s823 = scalar_lea.vmem %s5, 7
  %v824 = vld [vmem:[%s823] ss:$8 sm:$0xf]
  %v826 = vperm.slane %v824, 0
  %v827 = vperm.slane %v824, 1
  %v828 = vperm.slane %v824, 2
  %v829 = vperm.slane %v824, 3
  %v834 = vmul.f32 %v815, %v826
  %v835 = vmul.f32 %v811, %v827
  %v836 = vmul.f32 %v807, %v828
  %v837 = vmul.f32 %v819, %v829
  %v838 = vmul.f32 %v816, %v826
  %v839 = vmul.f32 %v812, %v827
  %v840 = vmul.f32 %v808, %v828
  %v841 = vmul.f32 %v820, %v829
  %v842 = vmul.f32 %v817, %v826
  %v843 = vmul.f32 %v813, %v827
  %v844 = vmul.f32 %v809, %v828
  %v845 = vmul.f32 %v821, %v829
  %v846 = vmul.f32 %v818, %v826
  %v847 = vmul.f32 %v814, %v827
  %v848 = vmul.f32 %v810, %v828
  %v849 = vmul.f32 %v822, %v829
  %v850 = vpack.c.bf16 %v835, %v834
  %v851 = vpack.c.bf16 %v837, %v836
  %v852 = vpack.c.bf16 %v839, %v838
  %v853 = vpack.c.bf16 %v841, %v840
  %v854 = vpack.c.bf16 %v843, %v842
  %v855 = vpack.c.bf16 %v845, %v844
  %v856 = vpack.c.bf16 %v847, %v846
  %v857 = vpack.c.bf16 %v849, %v848
  %858 = vrot.lane.b32.xlu0 %v218, 111
  %v859 = vpop.permute.xlu0 %858
  %860 = vrot.lane.b32.xlu0 %v222, 111
  %v861 = vpop.permute.xlu0 %860
  %862 = vrot.lane.b32.xlu0 %v226, 111
  %v863 = vpop.permute.xlu0 %862
  %864 = vrot.lane.b32.xlu0 %v230, 111
  %v865 = vpop.permute.xlu0 %864
  %866 = vrot.lane.b32.xlu0 %v219, 111
  %v867 = vpop.permute.xlu0 %866
  %868 = vrot.lane.b32.xlu0 %v223, 111
  %v869 = vpop.permute.xlu0 %868
  %870 = vrot.lane.b32.xlu0 %v227, 111
  %v871 = vpop.permute.xlu0 %870
  %872 = vrot.lane.b32.xlu0 %v231, 111
  %v873 = vpop.permute.xlu0 %872
  %874 = vrot.lane.b32.xlu0 %v220, 111
  %v875 = vpop.permute.xlu0 %874
  %876 = vrot.lane.b32.xlu0 %v224, 111
  %v877 = vpop.permute.xlu0 %876
  %878 = vrot.lane.b32.xlu0 %v228, 111
  %v879 = vpop.permute.xlu0 %878
  %880 = vrot.lane.b32.xlu0 %v232, 111
  %v881 = vpop.permute.xlu0 %880
  %882 = vrot.lane.b32.xlu0 %v221, 111
  %v883 = vpop.permute.xlu0 %882
  %884 = vrot.lane.b32.xlu0 %v225, 111
  %v885 = vpop.permute.xlu0 %884
  %886 = vrot.lane.b32.xlu0 %v229, 111
  %v887 = vpop.permute.xlu0 %886
  %888 = vrot.lane.b32.xlu0 %v233, 111
  %v889 = vpop.permute.xlu0 %888
  %vm890 = vcmp.lt.s32.totalorder %v267, 111
  %v891 = vsel %vm890, %v875, %v883
  %v892 = vsel %vm890, %v877, %v885
  %v893 = vsel %vm890, %v879, %v887
  %v894 = vsel %vm890, %v881, %v889
  %v895 = vsel %vm890, %v867, %v875
  %v896 = vsel %vm890, %v869, %v877
  %v897 = vsel %vm890, %v871, %v879
  %v898 = vsel %vm890, %v873, %v881
  %v899 = vsel %vm890, %v859, %v867
  %v900 = vsel %vm890, %v861, %v869
  %v901 = vsel %vm890, %v863, %v871
  %v902 = vsel %vm890, %v865, %v873
  %v903 = vsel %vm890, %v883, %v859
  %v904 = vsel %vm890, %v885, %v861
  %v905 = vsel %vm890, %v887, %v863
  %v906 = vsel %vm890, %v889, %v865
  %s907 = scalar_lea.vmem %s5, 32
  %v908 = vld [vmem:[%s907] ss:$8 sm:$0xf]
  %v910 = vperm.slane %v908, 0
  %v911 = vperm.slane %v908, 1
  %v912 = vperm.slane %v908, 2
  %v913 = vperm.slane %v908, 3
  %v918 = vmul.f32 %v899, %v910
  %v919 = vmul.f32 %v895, %v911
  %v920 = vmul.f32 %v891, %v912
  %v921 = vmul.f32 %v903, %v913
  %v922 = vmul.f32 %v900, %v910
  %v923 = vmul.f32 %v896, %v911
  %v924 = vmul.f32 %v892, %v912
  %v925 = vmul.f32 %v904, %v913
  %v926 = vmul.f32 %v901, %v910
  %v927 = vmul.f32 %v897, %v911
  %v928 = vmul.f32 %v893, %v912
  %v929 = vmul.f32 %v905, %v913
  %v930 = vmul.f32 %v902, %v910
  %v931 = vmul.f32 %v898, %v911
  %v932 = vmul.f32 %v894, %v912
  %v933 = vmul.f32 %v906, %v913
  %v934 = vpack.c.bf16 %v919, %v918
  %v935 = vpack.c.bf16 %v921, %v920
  %v936 = vpack.c.bf16 %v923, %v922
  %v937 = vpack.c.bf16 %v925, %v924
  %v938 = vpack.c.bf16 %v927, %v926
  %v939 = vpack.c.bf16 %v929, %v928
  %v940 = vpack.c.bf16 %v931, %v930
  %v941 = vpack.c.bf16 %v933, %v932
  %v950 = vunpack.c.l.b16 %v311
  %v951 = vunpack.c.h.b16 %v311
  %v952 = vunpack.c.l.b16 %v312
  %v953 = vunpack.c.h.b16 %v312
  %v954 = vunpack.c.l.b16 %v313
  %v955 = vunpack.c.h.b16 %v313
  %v956 = vunpack.c.l.b16 %v314
  %v957 = vunpack.c.h.b16 %v314
  %v958 = vunpack.c.l.b16 %v315
  %v959 = vunpack.c.h.b16 %v315
  %v960 = vunpack.c.l.b16 %v316
  %v961 = vunpack.c.h.b16 %v316
  %v962 = vunpack.c.l.b16 %v317
  %v963 = vunpack.c.h.b16 %v317
  %v964 = vunpack.c.l.b16 %v318
  %v965 = vunpack.c.h.b16 %v318
  %v966 = vpack.c.b16 %v954, %v950
  %v967 = vpack.c.b16 %v955, %v951
  %v968 = vpack.c.b16 %v956, %v952
  %v969 = vpack.c.b16 %v957, %v953
  %v970 = vpack.c.b16 %v962, %v958
  %v971 = vpack.c.b16 %v963, %v959
  %v972 = vpack.c.b16 %v964, %v960
  %v973 = vpack.c.b16 %v965, %v961
  %v990 = vunpack.c.l.b16 %v395
  %v991 = vunpack.c.h.b16 %v395
  %v992 = vunpack.c.l.b16 %v396
  %v993 = vunpack.c.h.b16 %v396
  %v994 = vunpack.c.l.b16 %v397
  %v995 = vunpack.c.h.b16 %v397
  %v996 = vunpack.c.l.b16 %v398
  %v997 = vunpack.c.h.b16 %v398
  %v998 = vunpack.c.l.b16 %v399
  %v999 = vunpack.c.h.b16 %v399
  %v1000 = vunpack.c.l.b16 %v400
  %v1001 = vunpack.c.h.b16 %v400
  %v1002 = vunpack.c.l.b16 %v401
  %v1003 = vunpack.c.h.b16 %v401
  %v1004 = vunpack.c.l.b16 %v402
  %v1005 = vunpack.c.h.b16 %v402
  %v1006 = vpack.c.b16 %v994, %v990
  %v1007 = vpack.c.b16 %v995, %v991
  %v1008 = vpack.c.b16 %v996, %v992
  %v1009 = vpack.c.b16 %v997, %v993
  %v1010 = vpack.c.b16 %v1002, %v998
  %v1011 = vpack.c.b16 %v1003, %v999
  %v1012 = vpack.c.b16 %v1004, %v1000
  %v1013 = vpack.c.b16 %v1005, %v1001
  %v1030 = vunpack.c.l.b16 %v479
  %v1031 = vunpack.c.h.b16 %v479
  %v1032 = vunpack.c.l.b16 %v480
  %v1033 = vunpack.c.h.b16 %v480
  %v1034 = vunpack.c.l.b16 %v481
  %v1035 = vunpack.c.h.b16 %v481
  %v1036 = vunpack.c.l.b16 %v482
  %v1037 = vunpack.c.h.b16 %v482
  %v1038 = vunpack.c.l.b16 %v483
  %v1039 = vunpack.c.h.b16 %v483
  %v1040 = vunpack.c.l.b16 %v484
  %v1041 = vunpack.c.h.b16 %v484
  %v1042 = vunpack.c.l.b16 %v485
  %v1043 = vunpack.c.h.b16 %v485
  %v1044 = vunpack.c.l.b16 %v486
  %v1045 = vunpack.c.h.b16 %v486
  %v1046 = vpack.c.b16 %v1034, %v1030
  %v1047 = vpack.c.b16 %v1035, %v1031
  %v1048 = vpack.c.b16 %v1036, %v1032
  %v1049 = vpack.c.b16 %v1037, %v1033
  %v1050 = vpack.c.b16 %v1042, %v1038
  %v1051 = vpack.c.b16 %v1043, %v1039
  %v1052 = vpack.c.b16 %v1044, %v1040
  %v1053 = vpack.c.b16 %v1045, %v1041
  %v1070 = vunpack.c.l.b16 %v563
  %v1071 = vunpack.c.h.b16 %v563
  %v1072 = vunpack.c.l.b16 %v564
  %v1073 = vunpack.c.h.b16 %v564
  %v1074 = vunpack.c.l.b16 %v565
  %v1075 = vunpack.c.h.b16 %v565
  %v1076 = vunpack.c.l.b16 %v566
  %v1077 = vunpack.c.h.b16 %v566
  %v1078 = vunpack.c.l.b16 %v567
  %v1079 = vunpack.c.h.b16 %v567
  %v1080 = vunpack.c.l.b16 %v568
  %v1081 = vunpack.c.h.b16 %v568
  %v1082 = vunpack.c.l.b16 %v569
  %v1083 = vunpack.c.h.b16 %v569
  %v1084 = vunpack.c.l.b16 %v570
  %v1085 = vunpack.c.h.b16 %v570
  %v1086 = vpack.c.b16 %v1074, %v1070
  %v1087 = vpack.c.b16 %v1075, %v1071
  %v1088 = vpack.c.b16 %v1076, %v1072
  %v1089 = vpack.c.b16 %v1077, %v1073
  %v1090 = vpack.c.b16 %v1082, %v1078
  %v1091 = vpack.c.b16 %v1083, %v1079
  %v1092 = vpack.c.b16 %v1084, %v1080
  %v1093 = vpack.c.b16 %v1085, %v1081
  %v1110 = vunpack.c.l.b16 %v598
  %v1111 = vunpack.c.h.b16 %v598
  %v1112 = vunpack.c.l.b16 %v599
  %v1113 = vunpack.c.h.b16 %v599
  %v1114 = vunpack.c.l.b16 %v600
  %v1115 = vunpack.c.h.b16 %v600
  %v1116 = vunpack.c.l.b16 %v601
  %v1117 = vunpack.c.h.b16 %v601
  %v1118 = vunpack.c.l.b16 %v602
  %v1119 = vunpack.c.h.b16 %v602
  %v1120 = vunpack.c.l.b16 %v603
  %v1121 = vunpack.c.h.b16 %v603
  %v1122 = vunpack.c.l.b16 %v604
  %v1123 = vunpack.c.h.b16 %v604
  %v1124 = vunpack.c.l.b16 %v605
  %v1125 = vunpack.c.h.b16 %v605
  %v1126 = vpack.c.b16 %v1114, %v1110
  %v1127 = vpack.c.b16 %v1115, %v1111
  %v1128 = vpack.c.b16 %v1116, %v1112
  %v1129 = vpack.c.b16 %v1117, %v1113
  %v1130 = vpack.c.b16 %v1122, %v1118
  %v1131 = vpack.c.b16 %v1123, %v1119
  %v1132 = vpack.c.b16 %v1124, %v1120
  %v1133 = vpack.c.b16 %v1125, %v1121
  %v1150 = vunpack.c.l.b16 %v682
  %v1151 = vunpack.c.h.b16 %v682
  %v1152 = vunpack.c.l.b16 %v683
  %v1153 = vunpack.c.h.b16 %v683
  %v1154 = vunpack.c.l.b16 %v684
  %v1155 = vunpack.c.h.b16 %v684
  %v1156 = vunpack.c.l.b16 %v685
  %v1157 = vunpack.c.h.b16 %v685
  %v1158 = vunpack.c.l.b16 %v686
  %v1159 = vunpack.c.h.b16 %v686
  %v1160 = vunpack.c.l.b16 %v687
  %v1161 = vunpack.c.h.b16 %v687
  %v1162 = vunpack.c.l.b16 %v688
  %v1163 = vunpack.c.h.b16 %v688
  %v1164 = vunpack.c.l.b16 %v689
  %v1165 = vunpack.c.h.b16 %v689
  %v1166 = vpack.c.b16 %v1154, %v1150
  %v1167 = vpack.c.b16 %v1155, %v1151
  %v1168 = vpack.c.b16 %v1156, %v1152
  %v1169 = vpack.c.b16 %v1157, %v1153
  %v1170 = vpack.c.b16 %v1162, %v1158
  %v1171 = vpack.c.b16 %v1163, %v1159
  %v1172 = vpack.c.b16 %v1164, %v1160
  %v1173 = vpack.c.b16 %v1165, %v1161
  %v1190 = vunpack.c.l.b16 %v766
  %v1191 = vunpack.c.h.b16 %v766
  %v1192 = vunpack.c.l.b16 %v767
  %v1193 = vunpack.c.h.b16 %v767
  %v1194 = vunpack.c.l.b16 %v768
  %v1195 = vunpack.c.h.b16 %v768
  %v1196 = vunpack.c.l.b16 %v769
  %v1197 = vunpack.c.h.b16 %v769
  %v1198 = vunpack.c.l.b16 %v770
  %v1199 = vunpack.c.h.b16 %v770
  %v1200 = vunpack.c.l.b16 %v771
  %v1201 = vunpack.c.h.b16 %v771
  %v1202 = vunpack.c.l.b16 %v772
  %v1203 = vunpack.c.h.b16 %v772
  %v1204 = vunpack.c.l.b16 %v773
  %v1205 = vunpack.c.h.b16 %v773
  %v1206 = vpack.c.b16 %v1194, %v1190
  %v1207 = vpack.c.b16 %v1195, %v1191
  %v1208 = vpack.c.b16 %v1196, %v1192
  %v1209 = vpack.c.b16 %v1197, %v1193
  %v1210 = vpack.c.b16 %v1202, %v1198
  %v1211 = vpack.c.b16 %v1203, %v1199
  %v1212 = vpack.c.b16 %v1204, %v1200
  %v1213 = vpack.c.b16 %v1205, %v1201
  %v1230 = vunpack.c.l.b16 %v850
  %v1231 = vunpack.c.h.b16 %v850
  %v1232 = vunpack.c.l.b16 %v851
  %v1233 = vunpack.c.h.b16 %v851
  %v1234 = vunpack.c.l.b16 %v852
  %v1235 = vunpack.c.h.b16 %v852
  %v1236 = vunpack.c.l.b16 %v853
  %v1237 = vunpack.c.h.b16 %v853
  %v1238 = vunpack.c.l.b16 %v854
  %v1239 = vunpack.c.h.b16 %v854
  %v1240 = vunpack.c.l.b16 %v855
  %v1241 = vunpack.c.h.b16 %v855
  %v1242 = vunpack.c.l.b16 %v856
  %v1243 = vunpack.c.h.b16 %v856
  %v1244 = vunpack.c.l.b16 %v857
  %v1245 = vunpack.c.h.b16 %v857
  %v1246 = vpack.c.b16 %v1234, %v1230
  %v1247 = vpack.c.b16 %v1235, %v1231
  %v1248 = vpack.c.b16 %v1236, %v1232
  %v1249 = vpack.c.b16 %v1237, %v1233
  %v1250 = vpack.c.b16 %v1242, %v1238
  %v1251 = vpack.c.b16 %v1243, %v1239
  %v1252 = vpack.c.b16 %v1244, %v1240
  %v1253 = vpack.c.b16 %v1245, %v1241
  %v1270 = vunpack.c.l.b16 %v934
  %v1271 = vunpack.c.h.b16 %v934
  %v1272 = vunpack.c.l.b16 %v935
  %v1273 = vunpack.c.h.b16 %v935
  %v1274 = vunpack.c.l.b16 %v936
  %v1275 = vunpack.c.h.b16 %v936
  %v1276 = vunpack.c.l.b16 %v937
  %v1277 = vunpack.c.h.b16 %v937
  %v1278 = vunpack.c.l.b16 %v938
  %v1279 = vunpack.c.h.b16 %v938
  %v1280 = vunpack.c.l.b16 %v939
  %v1281 = vunpack.c.h.b16 %v939
  %v1282 = vunpack.c.l.b16 %v940
  %v1283 = vunpack.c.h.b16 %v940
  %v1284 = vunpack.c.l.b16 %v941
  %v1285 = vunpack.c.h.b16 %v941
  %v1286 = vpack.c.b16 %v1274, %v1270
  %v1287 = vpack.c.b16 %v1275, %v1271
  %v1288 = vpack.c.b16 %v1276, %v1272
  %v1289 = vpack.c.b16 %v1277, %v1273
  %v1290 = vpack.c.b16 %v1282, %v1278
  %v1291 = vpack.c.b16 %v1283, %v1279
  %v1292 = vpack.c.b16 %v1284, %v1280
  %v1293 = vpack.c.b16 %v1285, %v1281
  %v1302 = vld [vmem:[%s3] sm:$0xff]
  %v1303 = vld [vmem:[%s3 + $0x8] sm:$0xf]
  %v1304 = vld [vmem:[%s3 + $0xc] sm:$0xff]
  %v1305 = vld [vmem:[%s3 + $0x14] sm:$0xf]
  %v1306 = vld [vmem:[%s3 + $0x18] sm:$0xff]
  %v1307 = vld [vmem:[%s3 + $0x20] sm:$0xf]
  %v1308 = vld [vmem:[%s3 + $0x24] sm:$0xff]
  %v1309 = vld [vmem:[%s3 + $0x2c] sm:$0xf]
  %v1310 = vld [vmem:[%s4] sm:$0xff]
  %v1311 = vld [vmem:[%s4 + $0x8] sm:$0xff]
  %v1312 = vld [vmem:[%s4 + $0x10] sm:$0xff]
  %v1313 = vld [vmem:[%s4 + $0x18] sm:$0xff]
  %1315 = vset.pattern.permute.xlu0 0
  %1316 = vperm.xlu0 %1315, %v1310
  %v1317 = vpop.permute.xlu0 %1316
  %1320 = vset.pattern.permute.xlu0 0
  %1321 = vperm.xlu0 %1320, %v1311
  %v1322 = vpop.permute.xlu0 %1321
  %1325 = vset.pattern.permute.xlu0 0
  %1326 = vperm.xlu0 %1325, %v1312
  %v1327 = vpop.permute.xlu0 %1326
  %1330 = vset.pattern.permute.xlu0 0
  %1331 = vperm.xlu0 %1330, %v1313
  %v1332 = vpop.permute.xlu0 %1331
  %v1342 = vunpack.c.l.b16 %v1302
  %v1343 = vunpack.c.h.b16 %v1302
  %v1344 = vunpack.c.l.b16 %v1303
  %v1345 = vunpack.c.l.b16 %v1304
  %v1346 = vunpack.c.h.b16 %v1304
  %v1347 = vunpack.c.l.b16 %v1305
  %v1348 = vunpack.c.l.b16 %v1306
  %v1349 = vunpack.c.h.b16 %v1306
  %v1350 = vunpack.c.l.b16 %v1307
  %v1351 = vunpack.c.l.b16 %v1308
  %v1352 = vunpack.c.h.b16 %v1308
  %v1353 = vunpack.c.l.b16 %v1309
  %v1354 = vpack.c.b16 %v1345, %v1342
  %v1355 = vpack.c.b16 %v1346, %v1343
  %v1356 = vpack.c.b16 %v1347, %v1344
  %v1357 = vpack.c.b16 %v1351, %v1348
  %v1358 = vpack.c.b16 %v1352, %v1349
  %v1359 = vpack.c.b16 %v1353, %v1350
  %vm1364 = vcmask 261120
  %v1366 = vsel %vm1364, %v1356, 0
  %v1369 = vsel %vm1364, %v1359, 0
  %1371 = vmatpush.bf16.msra.mxu0 %v1090
  %1372 = vmatpush.bf16.msra.mxu0 %v1086
  %1373 = vmatpush.bf16.msra.mxu0 %v1050
  %1374 = vmatpush.bf16.msra.mxu0 %v1046
  %1375 = vmatpush.bf16.msra.mxu0 %v1010
  %1376 = vmatpush.bf16.msra.mxu0 %v1006
  %1377 = vmatpush.bf16.msra.mxu0 %v970
  %1378 = vmatpush.bf16.msra.mxu0 %v966
  %1379 = vmatmul.bf16.gmra.mxu0 %v1354
  %v1380 = vpop.f32.mrf.mxu0
  %v1381 = vadd.f32 %v1317, %v1380
  %v1382 = vpop.f32.mrf.mxu0
  %v1383 = vadd.f32 %v1322, %v1382
  %1384 = vmatmul.bf16.gmra.mxu0 %v1357
  %v1385 = vpop.f32.mrf.mxu0
  %v1386 = vadd.f32 %v1327, %v1385
  %v1387 = vpop.f32.mrf.mxu0
  %v1388 = vadd.f32 %v1332, %v1387
  %1389 = vdwg.mxu0
  %1390 = vmatpush.bf16.msra.mxu0 %v1250
  %1391 = vmatpush.bf16.msra.mxu0 %v1246
  %1392 = vmatpush.bf16.msra.mxu0 %v1210
  %1393 = vmatpush.bf16.msra.mxu0 %v1206
  %1394 = vmatpush.bf16.msra.mxu0 %v1170
  %1395 = vmatpush.bf16.msra.mxu0 %v1166
  %1396 = vmatpush.bf16.msra.mxu0 %v1130
  %1397 = vmatpush.bf16.msra.mxu0 %v1126
  %1398 = vmatmul.bf16.gmra.mxu0 %v1355
  %v1399 = vpop.f32.mrf.mxu0
  %v1400 = vadd.f32 %v1381, %v1399
  %v1401 = vpop.f32.mrf.mxu0
  %v1402 = vadd.f32 %v1383, %v1401
  %1403 = vmatmul.bf16.gmra.mxu0 %v1358
  %v1404 = vpop.f32.mrf.mxu0
  %v1405 = vadd.f32 %v1386, %v1404
  %v1406 = vpop.f32.mrf.mxu0
  %v1407 = vadd.f32 %v1388, %v1406
  %1408 = vdwg.mxu0
  %1409 = vmatpush.bf16.msra.mxu0 0
  %1410 = vmatpush.bf16.msra.mxu0 0
  %1411 = vmatpush.bf16.msra.mxu0 0
  %1412 = vmatpush.bf16.msra.mxu0 0
  %1413 = vmatpush.bf16.msra.mxu0 0
  %1414 = vmatpush.bf16.msra.mxu0 0
  %1415 = vmatpush.bf16.msra.mxu0 %v1290
  %1416 = vmatpush.bf16.msra.mxu0 %v1286
  %1417 = vmatmul.bf16.gmra.mxu0 %v1366
  %v1418 = vpop.f32.mrf.mxu0
  %v1419 = vadd.f32 %v1400, %v1418
  %v1420 = vpop.f32.mrf.mxu0
  %v1421 = vadd.f32 %v1402, %v1420
  %1422 = vmatmul.bf16.gmra.mxu0 %v1369
  %v1423 = vpop.f32.mrf.mxu0
  %v1424 = vadd.f32 %v1405, %v1423
  %v1425 = vpop.f32.mrf.mxu0
  %v1426 = vadd.f32 %v1407, %v1425
  %1427 = vdwg.mxu0
  %1428 = vmatpush.bf16.msra.mxu0 %v1091
  %1429 = vmatpush.bf16.msra.mxu0 %v1087
  %1430 = vmatpush.bf16.msra.mxu0 %v1051
  %1431 = vmatpush.bf16.msra.mxu0 %v1047
  %1432 = vmatpush.bf16.msra.mxu0 %v1011
  %1433 = vmatpush.bf16.msra.mxu0 %v1007
  %1434 = vmatpush.bf16.msra.mxu0 %v971
  %1435 = vmatpush.bf16.msra.mxu0 %v967
  %1436 = vmatmul.bf16.gmra.mxu0 %v1354
  %v1437 = vpop.f32.mrf.mxu0
  %v1438 = vadd.f32 %v1317, %v1437
  %v1439 = vpop.f32.mrf.mxu0
  %v1440 = vadd.f32 %v1322, %v1439
  %1441 = vmatmul.bf16.gmra.mxu0 %v1357
  %v1442 = vpop.f32.mrf.mxu0
  %v1443 = vadd.f32 %v1327, %v1442
  %v1444 = vpop.f32.mrf.mxu0
  %v1445 = vadd.f32 %v1332, %v1444
  %1446 = vdwg.mxu0
  %1447 = vmatpush.bf16.msra.mxu0 %v1251
  %1448 = vmatpush.bf16.msra.mxu0 %v1247
  %1449 = vmatpush.bf16.msra.mxu0 %v1211
  %1450 = vmatpush.bf16.msra.mxu0 %v1207
  %1451 = vmatpush.bf16.msra.mxu0 %v1171
  %1452 = vmatpush.bf16.msra.mxu0 %v1167
  %1453 = vmatpush.bf16.msra.mxu0 %v1131
  %1454 = vmatpush.bf16.msra.mxu0 %v1127
  %1455 = vmatmul.bf16.gmra.mxu0 %v1355
  %v1456 = vpop.f32.mrf.mxu0
  %v1457 = vadd.f32 %v1438, %v1456
  %v1458 = vpop.f32.mrf.mxu0
  %v1459 = vadd.f32 %v1440, %v1458
  %1460 = vmatmul.bf16.gmra.mxu0 %v1358
  %v1461 = vpop.f32.mrf.mxu0
  %v1462 = vadd.f32 %v1443, %v1461
  %v1463 = vpop.f32.mrf.mxu0
  %v1464 = vadd.f32 %v1445, %v1463
  %1465 = vdwg.mxu0
  %1466 = vmatpush.bf16.msra.mxu0 0
  %1467 = vmatpush.bf16.msra.mxu0 0
  %1468 = vmatpush.bf16.msra.mxu0 0
  %1469 = vmatpush.bf16.msra.mxu0 0
  %1470 = vmatpush.bf16.msra.mxu0 0
  %1471 = vmatpush.bf16.msra.mxu0 0
  %1472 = vmatpush.bf16.msra.mxu0 %v1291
  %1473 = vmatpush.bf16.msra.mxu0 %v1287
  %1474 = vmatmul.bf16.gmra.mxu0 %v1366
  %v1475 = vpop.f32.mrf.mxu0
  %v1476 = vadd.f32 %v1457, %v1475
  %v1477 = vpop.f32.mrf.mxu0
  %v1478 = vadd.f32 %v1459, %v1477
  %1479 = vmatmul.bf16.gmra.mxu0 %v1369
  %v1480 = vpop.f32.mrf.mxu0
  %v1481 = vadd.f32 %v1462, %v1480
  %v1482 = vpop.f32.mrf.mxu0
  %v1483 = vadd.f32 %v1464, %v1482
  %1484 = vdwg.mxu0
  %1485 = vmatpush.bf16.msra.mxu0 %v1092
  %1486 = vmatpush.bf16.msra.mxu0 %v1088
  %1487 = vmatpush.bf16.msra.mxu0 %v1052
  %1488 = vmatpush.bf16.msra.mxu0 %v1048
  %1489 = vmatpush.bf16.msra.mxu0 %v1012
  %1490 = vmatpush.bf16.msra.mxu0 %v1008
  %1491 = vmatpush.bf16.msra.mxu0 %v972
  %1492 = vmatpush.bf16.msra.mxu0 %v968
  %1493 = vmatmul.bf16.gmra.mxu0 %v1354
  %v1494 = vpop.f32.mrf.mxu0
  %v1495 = vadd.f32 %v1317, %v1494
  %v1496 = vpop.f32.mrf.mxu0
  %v1497 = vadd.f32 %v1322, %v1496
  %1498 = vmatmul.bf16.gmra.mxu0 %v1357
  %v1499 = vpop.f32.mrf.mxu0
  %v1500 = vadd.f32 %v1327, %v1499
  %v1501 = vpop.f32.mrf.mxu0
  %v1502 = vadd.f32 %v1332, %v1501
  %1503 = vdwg.mxu0
  %1504 = vmatpush.bf16.msra.mxu0 %v1252
  %1505 = vmatpush.bf16.msra.mxu0 %v1248
  %1506 = vmatpush.bf16.msra.mxu0 %v1212
  %1507 = vmatpush.bf16.msra.mxu0 %v1208
  %1508 = vmatpush.bf16.msra.mxu0 %v1172
  %1509 = vmatpush.bf16.msra.mxu0 %v1168
  %1510 = vmatpush.bf16.msra.mxu0 %v1132
  %1511 = vmatpush.bf16.msra.mxu0 %v1128
  %1512 = vmatmul.bf16.gmra.mxu0 %v1355
  %v1513 = vpop.f32.mrf.mxu0
  %v1514 = vadd.f32 %v1495, %v1513
  %v1515 = vpop.f32.mrf.mxu0
  %v1516 = vadd.f32 %v1497, %v1515
  %1517 = vmatmul.bf16.gmra.mxu0 %v1358
  %v1518 = vpop.f32.mrf.mxu0
  %v1519 = vadd.f32 %v1500, %v1518
  %v1520 = vpop.f32.mrf.mxu0
  %v1521 = vadd.f32 %v1502, %v1520
  %1522 = vdwg.mxu0
  %1523 = vmatpush.bf16.msra.mxu0 0
  %1524 = vmatpush.bf16.msra.mxu0 0
  %1525 = vmatpush.bf16.msra.mxu0 0
  %1526 = vmatpush.bf16.msra.mxu0 0
  %1527 = vmatpush.bf16.msra.mxu0 0
  %1528 = vmatpush.bf16.msra.mxu0 0
  %1529 = vmatpush.bf16.msra.mxu0 %v1292
  %1530 = vmatpush.bf16.msra.mxu0 %v1288
  %1531 = vmatmul.bf16.gmra.mxu0 %v1366
  %v1532 = vpop.f32.mrf.mxu0
  %v1533 = vadd.f32 %v1514, %v1532
  %v1534 = vpop.f32.mrf.mxu0
  %v1535 = vadd.f32 %v1516, %v1534
  %1536 = vmatmul.bf16.gmra.mxu0 %v1369
  %v1537 = vpop.f32.mrf.mxu0
  %v1538 = vadd.f32 %v1519, %v1537
  %v1539 = vpop.f32.mrf.mxu0
  %v1540 = vadd.f32 %v1521, %v1539
  %1541 = vdwg.mxu0
  %1542 = vmatpush.bf16.msra.mxu0 %v1093
  %1543 = vmatpush.bf16.msra.mxu0 %v1089
  %1544 = vmatpush.bf16.msra.mxu0 %v1053
  %1545 = vmatpush.bf16.msra.mxu0 %v1049
  %1546 = vmatpush.bf16.msra.mxu0 %v1013
  %1547 = vmatpush.bf16.msra.mxu0 %v1009
  %1548 = vmatpush.bf16.msra.mxu0 %v973
  %1549 = vmatpush.bf16.msra.mxu0 %v969
  %1550 = vmatmul.bf16.gmra.mxu0 %v1354
  %v1551 = vpop.f32.mrf.mxu0
  %v1552 = vadd.f32 %v1317, %v1551
  %v1553 = vpop.f32.mrf.mxu0
  %v1554 = vadd.f32 %v1322, %v1553
  %1555 = vmatmul.bf16.gmra.mxu0 %v1357
  %v1556 = vpop.f32.mrf.mxu0
  %v1557 = vadd.f32 %v1327, %v1556
  %v1558 = vpop.f32.mrf.mxu0
  %v1559 = vadd.f32 %v1332, %v1558
  %1560 = vdwg.mxu0
  %1561 = vmatpush.bf16.msra.mxu0 %v1253
  %1562 = vmatpush.bf16.msra.mxu0 %v1249
  %1563 = vmatpush.bf16.msra.mxu0 %v1213
  %1564 = vmatpush.bf16.msra.mxu0 %v1209
  %1565 = vmatpush.bf16.msra.mxu0 %v1173
  %1566 = vmatpush.bf16.msra.mxu0 %v1169
  %1567 = vmatpush.bf16.msra.mxu0 %v1133
  %1568 = vmatpush.bf16.msra.mxu0 %v1129
  %1569 = vmatmul.bf16.gmra.mxu0 %v1355
  %v1570 = vpop.f32.mrf.mxu0
  %v1571 = vadd.f32 %v1552, %v1570
  %v1572 = vpop.f32.mrf.mxu0
  %v1573 = vadd.f32 %v1554, %v1572
  %1574 = vmatmul.bf16.gmra.mxu0 %v1358
  %v1575 = vpop.f32.mrf.mxu0
  %v1576 = vadd.f32 %v1557, %v1575
  %v1577 = vpop.f32.mrf.mxu0
  %v1578 = vadd.f32 %v1559, %v1577
  %1579 = vdwg.mxu0
  %1580 = vmatpush.bf16.msra.mxu0 0
  %1581 = vmatpush.bf16.msra.mxu0 0
  %1582 = vmatpush.bf16.msra.mxu0 0
  %1583 = vmatpush.bf16.msra.mxu0 0
  %1584 = vmatpush.bf16.msra.mxu0 0
  %1585 = vmatpush.bf16.msra.mxu0 0
  %1586 = vmatpush.bf16.msra.mxu0 %v1293
  %1587 = vmatpush.bf16.msra.mxu0 %v1289
  %1588 = vmatmul.bf16.gmra.mxu0 %v1366
  %v1589 = vpop.f32.mrf.mxu0
  %v1590 = vadd.f32 %v1571, %v1589
  %v1591 = vpop.f32.mrf.mxu0
  %v1592 = vadd.f32 %v1573, %v1591
  %1593 = vmatmul.bf16.gmra.mxu0 %v1369
  %v1594 = vpop.f32.mrf.mxu0
  %v1595 = vadd.f32 %v1576, %v1594
  %v1596 = vpop.f32.mrf.mxu0
  %v1597 = vadd.f32 %v1578, %v1596
  %1598 = vdwg.mxu0
  %v1599 = vmax.f32 %v1419, 0.0
  %v1600 = vmax.f32 %v1476, 0.0
  %v1601 = vmax.f32 %v1533, 0.0
  %v1602 = vmax.f32 %v1590, 0.0
  %v1603 = vmax.f32 %v1421, 0.0
  %v1604 = vmax.f32 %v1478, 0.0
  %v1605 = vmax.f32 %v1535, 0.0
  %v1606 = vmax.f32 %v1592, 0.0
  %v1607 = vmax.f32 %v1424, 0.0
  %v1608 = vmax.f32 %v1481, 0.0
  %v1609 = vmax.f32 %v1538, 0.0
  %v1610 = vmax.f32 %v1595, 0.0
  %v1611 = vmax.f32 %v1426, 0.0
  %v1612 = vmax.f32 %v1483, 0.0
  %v1613 = vmax.f32 %v1540, 0.0
  %v1614 = vmax.f32 %v1597, 0.0
  %1615 = vst [vmem:[%s6] sm:$0xff] %v1599
  %1616 = vst [vmem:[%s6 + $0x8] sm:$0xff] %v1600
  %1617 = vst [vmem:[%s6 + $0x10] sm:$0xff] %v1601
  %1618 = vst [vmem:[%s6 + $0x18] sm:$0xff] %v1602
  %1619 = vst [vmem:[%s6 + $0x20] sm:$0xff] %v1603
  %1620 = vst [vmem:[%s6 + $0x28] sm:$0xff] %v1604
  %1621 = vst [vmem:[%s6 + $0x30] sm:$0xff] %v1605
  %1622 = vst [vmem:[%s6 + $0x38] sm:$0xff] %v1606
  %1623 = vst [vmem:[%s6 + $0x40] sm:$0xff] %v1607
  %1624 = vst [vmem:[%s6 + $0x48] sm:$0xff] %v1608
  %1625 = vst [vmem:[%s6 + $0x50] sm:$0xff] %v1609
  %1626 = vst [vmem:[%s6 + $0x58] sm:$0xff] %v1610
  %1627 = vst [vmem:[%s6 + $0x60] sm:$0xff] %v1611
  %1628 = vst [vmem:[%s6 + $0x68] sm:$0xff] %v1612
  %1629 = vst [vmem:[%s6 + $0x70] sm:$0xff] %v1613
  %1630 = vst [vmem:[%s6 + $0x78] sm:$0xff] %v1614
  // Predicated region
  $region26: #{double_conv_forward.1} parent=0 // pred_check
    _
  $region27: #{double_conv_forward.1} parent=0 // pred_check_branch
    %1632 = sbr.rel (0) target = $region29
  $region28: #{double_conv_forward.1} parent=0 // pred_region
    _
  $region29: #{double_conv_forward.1} parent=0 // pred_fallthru
    _
  // Predicated region
  $region30: #{double_conv_forward.1} parent=0 // pred_check
    _
  $region31: #{double_conv_forward.1} parent=0 // pred_check_branch
    %1634 = sbr.rel (0) target = $region33
  $region32: #{double_conv_forward.1} parent=0 // pred_region
    _
  $region33: #{double_conv_forward.1} parent=0 // pred_fallthru
    _

</llo_original>
